<compile_context>
chip_gen: v6e
topology: v6e:2x2x1
jax: 0.10.0
libtpu: 0.0.40
codegen_flags: <defaults>
</compile_context>

<pallas_src>
import functools

import jax
import jax.numpy as jnp
from jax import lax
from jax.experimental import pallas as pl
from jax.experimental.pallas import tpu as pltpu

LANE = 128


def _round_up(n, m):
    return ((n + m - 1) // m) * m


# ------------------------------ Pallas kernel ------------------------------ #

def lstm_fc_bn_kernel(pg_ref, whh_ref, wfc_ref, bfc_ref, gamma_ref, beta_ref,
                      out_ref, hn_ref, cn_ref, lstm_sc,
                      *, seq_len, batch, hidden):
    """Fused LSTM recurrence + Linear + BatchNorm1d, everything VMEM-resident.

    pg_ref         : (T*B, 4H)  precomputed pregates (x @ W_ih^T + b), time-major
    whh_ref        : (4H, 4H)   hidden->gate weights; rows [H:) are zero
    wfc_ref        : (4H, Cp)   fc weights; rows [H:) are zero
    bfc/gamma/beta : (1, Cp)
    out_ref        : (B*T, Cp)  fc + BN output, batch-first rows, lane-dense
    hn_ref, cn_ref : (B, 4H)    final hidden / cell state (lanes [H:) zeroed)
    lstm_sc        : (B*T, 4H)  VMEM scratch holding every h_t, batch-first
    """
    G = whh_ref.shape[1]          # compact gate axis, 4*H (== 128 here)
    H = hidden

    h = jnp.zeros((batch, G), jnp.float32)   # valid lanes [0, H); rest inert
    c = jnp.zeros((batch, G), jnp.float32)

    # Recurrence, fully unrolled (seq_len small & static).  Serial path per
    # step: one 128x128 MXU push + 2 EUP launches + a few VPU ops.
    # TODO(synk): switch to lax.fori_loop reading pregates via pl.ds once T
    # grows past ~16 (bounds vreg live ranges / compile time).
    for t in range(seq_len):
        gates = (pg_ref[pl.ds(t * batch, batch), :]
                 + jnp.dot(h, whh_ref[...], preferred_element_type=jnp.float32))
        sig = jax.nn.sigmoid(gates)          # one EUP launch over whole vreg
        tnh = jnp.tanh(gates)                # one EUP launch over whole vreg
        # PyTorch gate order i,f,g,o along lanes; realign each H-wide gate to
        # lane group 0 with XLU rolls.  Lanes >= H carry bounded garbage that
        # never reaches a real output (W_hh / W_fc rows >= H are zero).
        i_g = sig
        f_g = pltpu.roll(sig, shift=G - H, axis=1)
        g_g = pltpu.roll(tnh, shift=G - 2 * H, axis=1)
        o_g = pltpu.roll(sig, shift=G - 3 * H, axis=1)
        c = f_g * c + i_g * g_g
        h = o_g * jnp.tanh(c)
        # Batch-first scratch rows (row = b*T + t) -> no post-kernel transpose.
        # B is tiny, so static per-row stores; use a strided store
        # lstm_sc[pl.ds(t, batch, stride=seq_len), :] = h once B grows.
        for b in range(batch):
            lstm_sc[pl.ds(b * seq_len + t, 1), :] = h[b:b + 1, :]

    # Zero the inert lanes so h_n / c_n outputs are well defined.
    lane = lax.broadcasted_iota(jnp.int32, (batch, G), 1)
    valid = (lane < H).astype(jnp.float32)
    hn_ref[...] = h * valid
    cn_ref[...] = c * valid

    # fc + BatchNorm1d (training mode, biased variance) on the resident slab.
    y = (jnp.dot(lstm_sc[...], wfc_ref[...], preferred_element_type=jnp.float32)
         + bfc_ref[...])                                          # (B*T, Cp)
    mean = jnp.mean(y, axis=0, keepdims=True)
    var = jnp.mean((y - mean) ** 2, axis=0, keepdims=True)
    y_hat = (y - mean) * lax.rsqrt(var + 1e-5)
    out_ref[...] = y_hat * gamma_ref[...] + beta_ref[...]


# ------------------------------- wrapper ----------------------------------- #

def lstm_forward(input_seq, params):
    emb_tab = params["embedding"]                       # (V, E)
    w_ih, w_hh = params["w_ih"], params["w_hh"]         # (4H, E), (4H, H)
    b = params["b_ih"] + params["b_hh"]                 # (4H,)
    w_fc, b_fc = params["w_fc"], params["b_fc"]         # (C, H), (C,)
    gamma, beta = params["gamma"], params["beta"]       # (C,), (C,)

    B, T = input_seq.shape
    H = w_hh.shape[1]
    C = w_fc.shape[0]
    G = 4 * H                    # compact gate axis; 4*32 = 128 = one lane grp
    assert G % LANE == 0, "gate axis must be lane-aligned (H=32 -> 4H=128)"
    Cp = _round_up(C, LANE)      # lane-dense fc/BN output

    # Embedding + input projection folded into one static (V, 4H) table, then
    # gathered by token id in time-major order (row = t*B + b).
    pregate_table = emb_tab @ w_ih.T + b                              # (V, 4H)
    idx_tm = input_seq.T.reshape(-1)
    pregates = jnp.take(pregate_table, idx_tm, axis=0)                # (T*B, 4H)

    whh_p = jnp.pad(w_hh.T, ((0, G - H), (0, 0)))                     # (4H, 4H)
    wfc_p = jnp.pad(w_fc.T, ((0, G - H), (0, Cp - C)))                # (4H, Cp)
    bfc_p = jnp.pad(b_fc[None, :], ((0, 0), (0, Cp - C)))             # (1, Cp)
    gamma_p = jnp.pad(gamma[None, :], ((0, 0), (0, Cp - C)))          # (1, Cp)
    beta_p = jnp.pad(beta[None, :], ((0, 0), (0, Cp - C)))            # (1, Cp)

    kernel = functools.partial(lstm_fc_bn_kernel, seq_len=T, batch=B, hidden=H)
    out_flat, hn_p, cn_p = pl.pallas_call(
        kernel,
        out_shape=(jax.ShapeDtypeStruct((B * T, Cp), jnp.float32),
                   jax.ShapeDtypeStruct((B, G), jnp.float32),
                   jax.ShapeDtypeStruct((B, G), jnp.float32)),
        scratch_shapes=[pltpu.VMEM((B * T, G), jnp.float32)],
    )(pregates, whh_p, wfc_p, bfc_p, gamma_p, beta_p)

    # Already batch-first: just reshape and strip the channel padding.
    output = out_flat.reshape(B, T, Cp)[:, :, :C]
    h_n = hn_p[:, :H][None]
    c_n = cn_p[:, :H][None]
    return output, (h_n, c_n)


# --------------------------- pure-JAX reference ----------------------------- #

def reference_forward(input_seq, params):
    emb = params["embedding"][input_seq]                 # (B, T, E)
    w_ih, w_hh = params["w_ih"], params["w_hh"]
    b = params["b_ih"] + params["b_hh"]
    B, T, _ = emb.shape
    H = w_hh.shape[1]

    def step(carry, x_t):
        h, c = carry
        gates = x_t @ w_ih.T + h @ w_hh.T + b
        i, f, g, o = jnp.split(gates, 4, axis=-1)
        i, f, o = jax.nn.sigmoid(i), jax.nn.sigmoid(f), jax.nn.sigmoid(o)
        g = jnp.tanh(g)
        c = f * c + i * g
        h = o * jnp.tanh(c)
        return (h, c), h

    h0 = jnp.zeros((B, H), jnp.float32)
    c0 = jnp.zeros((B, H), jnp.float32)
    (h_n, c_n), outs = lax.scan(step, (h0, c0), jnp.transpose(emb, (1, 0, 2)))
    lstm_out = jnp.transpose(outs, (1, 0, 2))            # (B, T, H)
    y = lstm_out @ params["w_fc"].T + params["b_fc"]     # (B, T, C)
    mean = jnp.mean(y, axis=(0, 1), keepdims=True)
    var = jnp.mean((y - mean) ** 2, axis=(0, 1), keepdims=True)
    y = (y - mean) * lax.rsqrt(var + 1e-5) * params["gamma"] + params["beta"]
    return y, (h_n[None], c_n[None])


# --------------------------------- main ------------------------------------ #

if __name__ == "__main__":
    V, E, H = 6, 16, 32          # vocab (brackets), emb_size, hidden_size
    C = V                        # num_char = vocab_size
    B, T = 2, 8                  # batch, sequence length

    key = jax.random.PRNGKey(0)
    ks = jax.random.split(key, 8)
    params = {
        "embedding": jax.random.normal(ks[0], (V, E), jnp.float32),
        "w_ih": jax.random.normal(ks[1], (4 * H, E), jnp.float32) * 0.1,
        "w_hh": jax.random.normal(ks[2], (4 * H, H), jnp.float32) * 0.1,
        "b_ih": jax.random.normal(ks[3], (4 * H,), jnp.float32) * 0.1,
        "b_hh": jax.random.normal(ks[4], (4 * H,), jnp.float32) * 0.1,
        "w_fc": jax.random.normal(ks[5], (C, H), jnp.float32) * 0.1,
        "b_fc": jax.random.normal(ks[6], (C,), jnp.float32) * 0.1,
        "gamma": jnp.ones((C,), jnp.float32),
        "beta": jnp.zeros((C,), jnp.float32),
    }
    input_seq = jax.random.randint(ks[7], (B, T), 0, V, dtype=jnp.int32)

    out, (h_n, c_n) = lstm_forward(input_seq, params)
    jax.block_until_ready(out)

    ref_out, (ref_h, ref_c) = reference_forward(input_seq, params)
    assert out.shape == (B, T, C) and h_n.shape == (1, B, H)
    assert jnp.allclose(out, ref_out, atol=1e-4, rtol=1e-4)
    assert jnp.allclose(h_n, ref_h, atol=1e-5, rtol=1e-5)
    assert jnp.allclose(c_n, ref_c, atol=1e-5, rtol=1e-5)
    print("KERNEL_OK")
</pallas_src>

<mosaic_0001>
module attributes {stable_mosaic.version = 11 : i64} {
  func.func @lstm_fc_bn_kernel(%arg0: memref<16x128xf32, #tpu.memory_space<vmem>>, %arg1: memref<128x128xf32, #tpu.memory_space<vmem>>, %arg2: memref<128x128xf32, #tpu.memory_space<vmem>>, %arg3: memref<1x128xf32, #tpu.memory_space<vmem>>, %arg4: memref<1x128xf32, #tpu.memory_space<vmem>>, %arg5: memref<1x128xf32, #tpu.memory_space<vmem>>, %arg6: memref<16x128xf32, #tpu.memory_space<vmem>>, %arg7: memref<2x128xf32, #tpu.memory_space<vmem>>, %arg8: memref<2x128xf32, #tpu.memory_space<vmem>>, %arg9: memref<16x128xf32, #tpu.memory_space<vmem>>) attributes {dimension_semantics = [], scalar_prefetch = 0 : i64, scratch_operands = 1 : i64, tpu.core_type = #tpu.core_type<tc>} {
    %cst = arith.constant 0.000000e+00 : f32
    %0 = vector.broadcast %cst : f32 to vector<2x128xf32>
    %cst_0 = arith.constant 0.000000e+00 : f32
    %1 = vector.broadcast %cst_0 : f32 to vector<2x128xf32>
    %c0 = arith.constant 0 : index
    %c0_1 = arith.constant 0 : index
    %2 = vector.load %arg0[%c0, %c0_1] : memref<16x128xf32, #tpu.memory_space<vmem>>, vector<2x128xf32>
    %c0_2 = arith.constant 0 : index
    %c0_3 = arith.constant 0 : index
    %3 = vector.load %arg1[%c0_2, %c0_3] : memref<128x128xf32, #tpu.memory_space<vmem>>, vector<128x128xf32>
    %cst_4 = arith.constant dense<0.000000e+00> : vector<2x128xf32>
    %4 = tpu.matmul %0, %3, %cst_4 {dimension_numbers = #tpu.dot_dimension_numbers<[1], [0], [0], [1], [0, 0, 1, 1], [], []>} : vector<2x128xf32>, vector<128x128xf32>, vector<2x128xf32> -> vector<2x128xf32>
    %5 = arith.addf %2, %4 : vector<2x128xf32>
    %6 = arith.negf %5 : vector<2x128xf32>
    %7 = math.exp %6 : vector<2x128xf32>
    %cst_5 = arith.constant 1.000000e+00 : f32
    %8 = vector.broadcast %cst_5 : f32 to vector<2x128xf32>
    %9 = arith.addf %8, %7 : vector<2x128xf32>
    %10 = arith.divf %8, %9 : vector<2x128xf32>
    %11 = math.tanh %5 : vector<2x128xf32>
    %c96_i32 = arith.constant 96 : i32
    %12 = tpu.dynamic_rotate %10 by %c96_i32 dim 1 : vector<2x128xf32>, i32 -> vector<2x128xf32>
    %c64_i32 = arith.constant 64 : i32
    %13 = tpu.dynamic_rotate %11 by %c64_i32 dim 1 : vector<2x128xf32>, i32 -> vector<2x128xf32>
    %c32_i32 = arith.constant 32 : i32
    %14 = tpu.dynamic_rotate %10 by %c32_i32 dim 1 : vector<2x128xf32>, i32 -> vector<2x128xf32>
    %15 = arith.mulf %12, %1 : vector<2x128xf32>
    %16 = arith.mulf %10, %13 : vector<2x128xf32>
    %17 = arith.addf %15, %16 : vector<2x128xf32>
    %18 = math.tanh %17 : vector<2x128xf32>
    %19 = arith.mulf %14, %18 : vector<2x128xf32>
    %20 = vector.extract_strided_slice %19 {offsets = [0, 0], sizes = [1, 128], strides = [1, 1]} : vector<2x128xf32> to vector<1x128xf32>
    %c0_6 = arith.constant 0 : index
    %c0_7 = arith.constant 0 : index
    %21 = vector.load %arg9[%c0_6, %c0_7] : memref<16x128xf32, #tpu.memory_space<vmem>>, vector<1x128xf32>
    tpu.vector_store %arg9[%c0_6, %c0_7], %20 {strides = array<i32>} : memref<16x128xf32, #tpu.memory_space<vmem>>, vector<1x128xf32>,
    %22 = vector.extract_strided_slice %19 {offsets = [1, 0], sizes = [1, 128], strides = [1, 1]} : vector<2x128xf32> to vector<1x128xf32>
    %c8 = arith.constant 8 : index
    %c0_8 = arith.constant 0 : index
    %23 = vector.load %arg9[%c8, %c0_8] : memref<16x128xf32, #tpu.memory_space<vmem>>, vector<1x128xf32>
    tpu.vector_store %arg9[%c8, %c0_8], %22 {strides = array<i32>} : memref<16x128xf32, #tpu.memory_space<vmem>>, vector<1x128xf32>,
    %c2 = arith.constant 2 : index
    %c0_9 = arith.constant 0 : index
    %24 = vector.load %arg0[%c2, %c0_9] : memref<16x128xf32, #tpu.memory_space<vmem>>, vector<2x128xf32>
    %c0_10 = arith.constant 0 : index
    %c0_11 = arith.constant 0 : index
    %25 = vector.load %arg1[%c0_10, %c0_11] : memref<128x128xf32, #tpu.memory_space<vmem>>, vector<128x128xf32>
    %cst_12 = arith.constant dense<0.000000e+00> : vector<2x128xf32>
    %26 = tpu.matmul %19, %25, %cst_12 {dimension_numbers = #tpu.dot_dimension_numbers<[1], [0], [0], [1], [0, 0, 1, 1], [], []>} : vector<2x128xf32>, vector<128x128xf32>, vector<2x128xf32> -> vector<2x128xf32>
    %27 = arith.addf %24, %26 : vector<2x128xf32>
    %28 = arith.negf %27 : vector<2x128xf32>
    %29 = math.exp %28 : vector<2x128xf32>
    %cst_13 = arith.constant 1.000000e+00 : f32
    %30 = vector.broadcast %cst_13 : f32 to vector<2x128xf32>
    %31 = arith.addf %30, %29 : vector<2x128xf32>
    %32 = arith.divf %30, %31 : vector<2x128xf32>
    %33 = math.tanh %27 : vector<2x128xf32>
    %c96_i32_14 = arith.constant 96 : i32
    %34 = tpu.dynamic_rotate %32 by %c96_i32_14 dim 1 : vector<2x128xf32>, i32 -> vector<2x128xf32>
    %c64_i32_15 = arith.constant 64 : i32
    %35 = tpu.dynamic_rotate %33 by %c64_i32_15 dim 1 : vector<2x128xf32>, i32 -> vector<2x128xf32>
    %c32_i32_16 = arith.constant 32 : i32
    %36 = tpu.dynamic_rotate %32 by %c32_i32_16 dim 1 : vector<2x128xf32>, i32 -> vector<2x128xf32>
    %37 = arith.mulf %34, %17 : vector<2x128xf32>
    %38 = arith.mulf %32, %35 : vector<2x128xf32>
    %39 = arith.addf %37, %38 : vector<2x128xf32>
    %40 = math.tanh %39 : vector<2x128xf32>
    %41 = arith.mulf %36, %40 : vector<2x128xf32>
    %42 = vector.extract_strided_slice %41 {offsets = [0, 0], sizes = [1, 128], strides = [1, 1]} : vector<2x128xf32> to vector<1x128xf32>
    %c1 = arith.constant 1 : index
    %c0_17 = arith.constant 0 : index
    %43 = vector.load %arg9[%c1, %c0_17] : memref<16x128xf32, #tpu.memory_space<vmem>>, vector<1x128xf32>
    tpu.vector_store %arg9[%c1, %c0_17], %42 {strides = array<i32>} : memref<16x128xf32, #tpu.memory_space<vmem>>, vector<1x128xf32>,
    %44 = vector.extract_strided_slice %41 {offsets = [1, 0], sizes = [1, 128], strides = [1, 1]} : vector<2x128xf32> to vector<1x128xf32>
    %c9 = arith.constant 9 : index
    %c0_18 = arith.constant 0 : index
    %45 = vector.load %arg9[%c9, %c0_18] : memref<16x128xf32, #tpu.memory_space<vmem>>, vector<1x128xf32>
    tpu.vector_store %arg9[%c9, %c0_18], %44 {strides = array<i32>} : memref<16x128xf32, #tpu.memory_space<vmem>>, vector<1x128xf32>,
    %c4 = arith.constant 4 : index
    %c0_19 = arith.constant 0 : index
    %46 = vector.load %arg0[%c4, %c0_19] : memref<16x128xf32, #tpu.memory_space<vmem>>, vector<2x128xf32>
    %c0_20 = arith.constant 0 : index
    %c0_21 = arith.constant 0 : index
    %47 = vector.load %arg1[%c0_20, %c0_21] : memref<128x128xf32, #tpu.memory_space<vmem>>, vector<128x128xf32>
    %cst_22 = arith.constant dense<0.000000e+00> : vector<2x128xf32>
    %48 = tpu.matmul %41, %47, %cst_22 {dimension_numbers = #tpu.dot_dimension_numbers<[1], [0], [0], [1], [0, 0, 1, 1], [], []>} : vector<2x128xf32>, vector<128x128xf32>, vector<2x128xf32> -> vector<2x128xf32>
    %49 = arith.addf %46, %48 : vector<2x128xf32>
    %50 = arith.negf %49 : vector<2x128xf32>
    %51 = math.exp %50 : vector<2x128xf32>
    %cst_23 = arith.constant 1.000000e+00 : f32
    %52 = vector.broadcast %cst_23 : f32 to vector<2x128xf32>
    %53 = arith.addf %52, %51 : vector<2x128xf32>
    %54 = arith.divf %52, %53 : vector<2x128xf32>
    %55 = math.tanh %49 : vector<2x128xf32>
    %c96_i32_24 = arith.constant 96 : i32
    %56 = tpu.dynamic_rotate %54 by %c96_i32_24 dim 1 : vector<2x128xf32>, i32 -> vector<2x128xf32>
    %c64_i32_25 = arith.constant 64 : i32
    %57 = tpu.dynamic_rotate %55 by %c64_i32_25 dim 1 : vector<2x128xf32>, i32 -> vector<2x128xf32>
    %c32_i32_26 = arith.constant 32 : i32
    %58 = tpu.dynamic_rotate %54 by %c32_i32_26 dim 1 : vector<2x128xf32>, i32 -> vector<2x128xf32>
    %59 = arith.mulf %56, %39 : vector<2x128xf32>
    %60 = arith.mulf %54, %57 : vector<2x128xf32>
    %61 = arith.addf %59, %60 : vector<2x128xf32>
    %62 = math.tanh %61 : vector<2x128xf32>
    %63 = arith.mulf %58, %62 : vector<2x128xf32>
    %64 = vector.extract_strided_slice %63 {offsets = [0, 0], sizes = [1, 128], strides = [1, 1]} : vector<2x128xf32> to vector<1x128xf32>
    %c2_27 = arith.constant 2 : index
    %c0_28 = arith.constant 0 : index
    %65 = vector.load %arg9[%c2_27, %c0_28] : memref<16x128xf32, #tpu.memory_space<vmem>>, vector<1x128xf32>
    tpu.vector_store %arg9[%c2_27, %c0_28], %64 {strides = array<i32>} : memref<16x128xf32, #tpu.memory_space<vmem>>, vector<1x128xf32>,
    %66 = vector.extract_strided_slice %63 {offsets = [1, 0], sizes = [1, 128], strides = [1, 1]} : vector<2x128xf32> to vector<1x128xf32>
    %c10 = arith.constant 10 : index
    %c0_29 = arith.constant 0 : index
    %67 = vector.load %arg9[%c10, %c0_29] : memref<16x128xf32, #tpu.memory_space<vmem>>, vector<1x128xf32>
    tpu.vector_store %arg9[%c10, %c0_29], %66 {strides = array<i32>} : memref<16x128xf32, #tpu.memory_space<vmem>>, vector<1x128xf32>,
    %c6 = arith.constant 6 : index
    %c0_30 = arith.constant 0 : index
    %68 = vector.load %arg0[%c6, %c0_30] : memref<16x128xf32, #tpu.memory_space<vmem>>, vector<2x128xf32>
    %c0_31 = arith.constant 0 : index
    %c0_32 = arith.constant 0 : index
    %69 = vector.load %arg1[%c0_31, %c0_32] : memref<128x128xf32, #tpu.memory_space<vmem>>, vector<128x128xf32>
    %cst_33 = arith.constant dense<0.000000e+00> : vector<2x128xf32>
    %70 = tpu.matmul %63, %69, %cst_33 {dimension_numbers = #tpu.dot_dimension_numbers<[1], [0], [0], [1], [0, 0, 1, 1], [], []>} : vector<2x128xf32>, vector<128x128xf32>, vector<2x128xf32> -> vector<2x128xf32>
    %71 = arith.addf %68, %70 : vector<2x128xf32>
    %72 = arith.negf %71 : vector<2x128xf32>
    %73 = math.exp %72 : vector<2x128xf32>
    %cst_34 = arith.constant 1.000000e+00 : f32
    %74 = vector.broadcast %cst_34 : f32 to vector<2x128xf32>
    %75 = arith.addf %74, %73 : vector<2x128xf32>
    %76 = arith.divf %74, %75 : vector<2x128xf32>
    %77 = math.tanh %71 : vector<2x128xf32>
    %c96_i32_35 = arith.constant 96 : i32
    %78 = tpu.dynamic_rotate %76 by %c96_i32_35 dim 1 : vector<2x128xf32>, i32 -> vector<2x128xf32>
    %c64_i32_36 = arith.constant 64 : i32
    %79 = tpu.dynamic_rotate %77 by %c64_i32_36 dim 1 : vector<2x128xf32>, i32 -> vector<2x128xf32>
    %c32_i32_37 = arith.constant 32 : i32
    %80 = tpu.dynamic_rotate %76 by %c32_i32_37 dim 1 : vector<2x128xf32>, i32 -> vector<2x128xf32>
    %81 = arith.mulf %78, %61 : vector<2x128xf32>
    %82 = arith.mulf %76, %79 : vector<2x128xf32>
    %83 = arith.addf %81, %82 : vector<2x128xf32>
    %84 = math.tanh %83 : vector<2x128xf32>
    %85 = arith.mulf %80, %84 : vector<2x128xf32>
    %86 = vector.extract_strided_slice %85 {offsets = [0, 0], sizes = [1, 128], strides = [1, 1]} : vector<2x128xf32> to vector<1x128xf32>
    %c3 = arith.constant 3 : index
    %c0_38 = arith.constant 0 : index
    %87 = vector.load %arg9[%c3, %c0_38] : memref<16x128xf32, #tpu.memory_space<vmem>>, vector<1x128xf32>
    tpu.vector_store %arg9[%c3, %c0_38], %86 {strides = array<i32>} : memref<16x128xf32, #tpu.memory_space<vmem>>, vector<1x128xf32>,
    %88 = vector.extract_strided_slice %85 {offsets = [1, 0], sizes = [1, 128], strides = [1, 1]} : vector<2x128xf32> to vector<1x128xf32>
    %c11 = arith.constant 11 : index
    %c0_39 = arith.constant 0 : index
    %89 = vector.load %arg9[%c11, %c0_39] : memref<16x128xf32, #tpu.memory_space<vmem>>, vector<1x128xf32>
    tpu.vector_store %arg9[%c11, %c0_39], %88 {strides = array<i32>} : memref<16x128xf32, #tpu.memory_space<vmem>>, vector<1x128xf32>,
    %c8_40 = arith.constant 8 : index
    %c0_41 = arith.constant 0 : index
    %90 = vector.load %arg0[%c8_40, %c0_41] : memref<16x128xf32, #tpu.memory_space<vmem>>, vector<2x128xf32>
    %c0_42 = arith.constant 0 : index
    %c0_43 = arith.constant 0 : index
    %91 = vector.load %arg1[%c0_42, %c0_43] : memref<128x128xf32, #tpu.memory_space<vmem>>, vector<128x128xf32>
    %cst_44 = arith.constant dense<0.000000e+00> : vector<2x128xf32>
    %92 = tpu.matmul %85, %91, %cst_44 {dimension_numbers = #tpu.dot_dimension_numbers<[1], [0], [0], [1], [0, 0, 1, 1], [], []>} : vector<2x128xf32>, vector<128x128xf32>, vector<2x128xf32> -> vector<2x128xf32>
    %93 = arith.addf %90, %92 : vector<2x128xf32>
    %94 = arith.negf %93 : vector<2x128xf32>
    %95 = math.exp %94 : vector<2x128xf32>
    %cst_45 = arith.constant 1.000000e+00 : f32
    %96 = vector.broadcast %cst_45 : f32 to vector<2x128xf32>
    %97 = arith.addf %96, %95 : vector<2x128xf32>
    %98 = arith.divf %96, %97 : vector<2x128xf32>
    %99 = math.tanh %93 : vector<2x128xf32>
    %c96_i32_46 = arith.constant 96 : i32
    %100 = tpu.dynamic_rotate %98 by %c96_i32_46 dim 1 : vector<2x128xf32>, i32 -> vector<2x128xf32>
    %c64_i32_47 = arith.constant 64 : i32
    %101 = tpu.dynamic_rotate %99 by %c64_i32_47 dim 1 : vector<2x128xf32>, i32 -> vector<2x128xf32>
    %c32_i32_48 = arith.constant 32 : i32
    %102 = tpu.dynamic_rotate %98 by %c32_i32_48 dim 1 : vector<2x128xf32>, i32 -> vector<2x128xf32>
    %103 = arith.mulf %100, %83 : vector<2x128xf32>
    %104 = arith.mulf %98, %101 : vector<2x128xf32>
    %105 = arith.addf %103, %104 : vector<2x128xf32>
    %106 = math.tanh %105 : vector<2x128xf32>
    %107 = arith.mulf %102, %106 : vector<2x128xf32>
    %108 = vector.extract_strided_slice %107 {offsets = [0, 0], sizes = [1, 128], strides = [1, 1]} : vector<2x128xf32> to vector<1x128xf32>
    %c4_49 = arith.constant 4 : index
    %c0_50 = arith.constant 0 : index
    %109 = vector.load %arg9[%c4_49, %c0_50] : memref<16x128xf32, #tpu.memory_space<vmem>>, vector<1x128xf32>
    tpu.vector_store %arg9[%c4_49, %c0_50], %108 {strides = array<i32>} : memref<16x128xf32, #tpu.memory_space<vmem>>, vector<1x128xf32>,
    %110 = vector.extract_strided_slice %107 {offsets = [1, 0], sizes = [1, 128], strides = [1, 1]} : vector<2x128xf32> to vector<1x128xf32>
    %c12 = arith.constant 12 : index
    %c0_51 = arith.constant 0 : index
    %111 = vector.load %arg9[%c12, %c0_51] : memref<16x128xf32, #tpu.memory_space<vmem>>, vector<1x128xf32>
    tpu.vector_store %arg9[%c12, %c0_51], %110 {strides = array<i32>} : memref<16x128xf32, #tpu.memory_space<vmem>>, vector<1x128xf32>,
    %c10_52 = arith.constant 10 : index
    %c0_53 = arith.constant 0 : index
    %112 = vector.load %arg0[%c10_52, %c0_53] : memref<16x128xf32, #tpu.memory_space<vmem>>, vector<2x128xf32>
    %c0_54 = arith.constant 0 : index
    %c0_55 = arith.constant 0 : index
    %113 = vector.load %arg1[%c0_54, %c0_55] : memref<128x128xf32, #tpu.memory_space<vmem>>, vector<128x128xf32>
    %cst_56 = arith.constant dense<0.000000e+00> : vector<2x128xf32>
    %114 = tpu.matmul %107, %113, %cst_56 {dimension_numbers = #tpu.dot_dimension_numbers<[1], [0], [0], [1], [0, 0, 1, 1], [], []>} : vector<2x128xf32>, vector<128x128xf32>, vector<2x128xf32> -> vector<2x128xf32>
    %115 = arith.addf %112, %114 : vector<2x128xf32>
    %116 = arith.negf %115 : vector<2x128xf32>
    %117 = math.exp %116 : vector<2x128xf32>
    %cst_57 = arith.constant 1.000000e+00 : f32
    %118 = vector.broadcast %cst_57 : f32 to vector<2x128xf32>
    %119 = arith.addf %118, %117 : vector<2x128xf32>
    %120 = arith.divf %118, %119 : vector<2x128xf32>
    %121 = math.tanh %115 : vector<2x128xf32>
    %c96_i32_58 = arith.constant 96 : i32
    %122 = tpu.dynamic_rotate %120 by %c96_i32_58 dim 1 : vector<2x128xf32>, i32 -> vector<2x128xf32>
    %c64_i32_59 = arith.constant 64 : i32
    %123 = tpu.dynamic_rotate %121 by %c64_i32_59 dim 1 : vector<2x128xf32>, i32 -> vector<2x128xf32>
    %c32_i32_60 = arith.constant 32 : i32
    %124 = tpu.dynamic_rotate %120 by %c32_i32_60 dim 1 : vector<2x128xf32>, i32 -> vector<2x128xf32>
    %125 = arith.mulf %122, %105 : vector<2x128xf32>
    %126 = arith.mulf %120, %123 : vector<2x128xf32>
    %127 = arith.addf %125, %126 : vector<2x128xf32>
    %128 = math.tanh %127 : vector<2x128xf32>
    %129 = arith.mulf %124, %128 : vector<2x128xf32>
    %130 = vector.extract_strided_slice %129 {offsets = [0, 0], sizes = [1, 128], strides = [1, 1]} : vector<2x128xf32> to vector<1x128xf32>
    %c5 = arith.constant 5 : index
    %c0_61 = arith.constant 0 : index
    %131 = vector.load %arg9[%c5, %c0_61] : memref<16x128xf32, #tpu.memory_space<vmem>>, vector<1x128xf32>
    tpu.vector_store %arg9[%c5, %c0_61], %130 {strides = array<i32>} : memref<16x128xf32, #tpu.memory_space<vmem>>, vector<1x128xf32>,
    %132 = vector.extract_strided_slice %129 {offsets = [1, 0], sizes = [1, 128], strides = [1, 1]} : vector<2x128xf32> to vector<1x128xf32>
    %c13 = arith.constant 13 : index
    %c0_62 = arith.constant 0 : index
    %133 = vector.load %arg9[%c13, %c0_62] : memref<16x128xf32, #tpu.memory_space<vmem>>, vector<1x128xf32>
    tpu.vector_store %arg9[%c13, %c0_62], %132 {strides = array<i32>} : memref<16x128xf32, #tpu.memory_space<vmem>>, vector<1x128xf32>,
    %c12_63 = arith.constant 12 : index
    %c0_64 = arith.constant 0 : index
    %134 = vector.load %arg0[%c12_63, %c0_64] : memref<16x128xf32, #tpu.memory_space<vmem>>, vector<2x128xf32>
    %c0_65 = arith.constant 0 : index
    %c0_66 = arith.constant 0 : index
    %135 = vector.load %arg1[%c0_65, %c0_66] : memref<128x128xf32, #tpu.memory_space<vmem>>, vector<128x128xf32>
    %cst_67 = arith.constant dense<0.000000e+00> : vector<2x128xf32>
    %136 = tpu.matmul %129, %135, %cst_67 {dimension_numbers = #tpu.dot_dimension_numbers<[1], [0], [0], [1], [0, 0, 1, 1], [], []>} : vector<2x128xf32>, vector<128x128xf32>, vector<2x128xf32> -> vector<2x128xf32>
    %137 = arith.addf %134, %136 : vector<2x128xf32>
    %138 = arith.negf %137 : vector<2x128xf32>
    %139 = math.exp %138 : vector<2x128xf32>
    %cst_68 = arith.constant 1.000000e+00 : f32
    %140 = vector.broadcast %cst_68 : f32 to vector<2x128xf32>
    %141 = arith.addf %140, %139 : vector<2x128xf32>
    %142 = arith.divf %140, %141 : vector<2x128xf32>
    %143 = math.tanh %137 : vector<2x128xf32>
    %c96_i32_69 = arith.constant 96 : i32
    %144 = tpu.dynamic_rotate %142 by %c96_i32_69 dim 1 : vector<2x128xf32>, i32 -> vector<2x128xf32>
    %c64_i32_70 = arith.constant 64 : i32
    %145 = tpu.dynamic_rotate %143 by %c64_i32_70 dim 1 : vector<2x128xf32>, i32 -> vector<2x128xf32>
    %c32_i32_71 = arith.constant 32 : i32
    %146 = tpu.dynamic_rotate %142 by %c32_i32_71 dim 1 : vector<2x128xf32>, i32 -> vector<2x128xf32>
    %147 = arith.mulf %144, %127 : vector<2x128xf32>
    %148 = arith.mulf %142, %145 : vector<2x128xf32>
    %149 = arith.addf %147, %148 : vector<2x128xf32>
    %150 = math.tanh %149 : vector<2x128xf32>
    %151 = arith.mulf %146, %150 : vector<2x128xf32>
    %152 = vector.extract_strided_slice %151 {offsets = [0, 0], sizes = [1, 128], strides = [1, 1]} : vector<2x128xf32> to vector<1x128xf32>
    %c6_72 = arith.constant 6 : index
    %c0_73 = arith.constant 0 : index
    %153 = vector.load %arg9[%c6_72, %c0_73] : memref<16x128xf32, #tpu.memory_space<vmem>>, vector<1x128xf32>
    tpu.vector_store %arg9[%c6_72, %c0_73], %152 {strides = array<i32>} : memref<16x128xf32, #tpu.memory_space<vmem>>, vector<1x128xf32>,
    %154 = vector.extract_strided_slice %151 {offsets = [1, 0], sizes = [1, 128], strides = [1, 1]} : vector<2x128xf32> to vector<1x128xf32>
    %c14 = arith.constant 14 : index
    %c0_74 = arith.constant 0 : index
    %155 = vector.load %arg9[%c14, %c0_74] : memref<16x128xf32, #tpu.memory_space<vmem>>, vector<1x128xf32>
    tpu.vector_store %arg9[%c14, %c0_74], %154 {strides = array<i32>} : memref<16x128xf32, #tpu.memory_space<vmem>>, vector<1x128xf32>,
    %c14_75 = arith.constant 14 : index
    %c0_76 = arith.constant 0 : index
    %156 = vector.load %arg0[%c14_75, %c0_76] : memref<16x128xf32, #tpu.memory_space<vmem>>, vector<2x128xf32>
    %c0_77 = arith.constant 0 : index
    %c0_78 = arith.constant 0 : index
    %157 = vector.load %arg1[%c0_77, %c0_78] : memref<128x128xf32, #tpu.memory_space<vmem>>, vector<128x128xf32>
    %cst_79 = arith.constant dense<0.000000e+00> : vector<2x128xf32>
    %158 = tpu.matmul %151, %157, %cst_79 {dimension_numbers = #tpu.dot_dimension_numbers<[1], [0], [0], [1], [0, 0, 1, 1], [], []>} : vector<2x128xf32>, vector<128x128xf32>, vector<2x128xf32> -> vector<2x128xf32>
    %159 = arith.addf %156, %158 : vector<2x128xf32>
    %160 = arith.negf %159 : vector<2x128xf32>
    %161 = math.exp %160 : vector<2x128xf32>
    %cst_80 = arith.constant 1.000000e+00 : f32
    %162 = vector.broadcast %cst_80 : f32 to vector<2x128xf32>
    %163 = arith.addf %162, %161 : vector<2x128xf32>
    %164 = arith.divf %162, %163 : vector<2x128xf32>
    %165 = math.tanh %159 : vector<2x128xf32>
    %c96_i32_81 = arith.constant 96 : i32
    %166 = tpu.dynamic_rotate %164 by %c96_i32_81 dim 1 : vector<2x128xf32>, i32 -> vector<2x128xf32>
    %c64_i32_82 = arith.constant 64 : i32
    %167 = tpu.dynamic_rotate %165 by %c64_i32_82 dim 1 : vector<2x128xf32>, i32 -> vector<2x128xf32>
    %c32_i32_83 = arith.constant 32 : i32
    %168 = tpu.dynamic_rotate %164 by %c32_i32_83 dim 1 : vector<2x128xf32>, i32 -> vector<2x128xf32>
    %169 = arith.mulf %166, %149 : vector<2x128xf32>
    %170 = arith.mulf %164, %167 : vector<2x128xf32>
    %171 = arith.addf %169, %170 : vector<2x128xf32>
    %172 = math.tanh %171 : vector<2x128xf32>
    %173 = arith.mulf %168, %172 : vector<2x128xf32>
    %174 = vector.extract_strided_slice %173 {offsets = [0, 0], sizes = [1, 128], strides = [1, 1]} : vector<2x128xf32> to vector<1x128xf32>
    %c7 = arith.constant 7 : index
    %c0_84 = arith.constant 0 : index
    %175 = vector.load %arg9[%c7, %c0_84] : memref<16x128xf32, #tpu.memory_space<vmem>>, vector<1x128xf32>
    tpu.vector_store %arg9[%c7, %c0_84], %174 {strides = array<i32>} : memref<16x128xf32, #tpu.memory_space<vmem>>, vector<1x128xf32>,
    %176 = vector.extract_strided_slice %173 {offsets = [1, 0], sizes = [1, 128], strides = [1, 1]} : vector<2x128xf32> to vector<1x128xf32>
    %c15 = arith.constant 15 : index
    %c0_85 = arith.constant 0 : index
    %177 = vector.load %arg9[%c15, %c0_85] : memref<16x128xf32, #tpu.memory_space<vmem>>, vector<1x128xf32>
    tpu.vector_store %arg9[%c15, %c0_85], %176 {strides = array<i32>} : memref<16x128xf32, #tpu.memory_space<vmem>>, vector<1x128xf32>,
    %178 = tpu.iota {dimensions = array<i32: 1>} : vector<2x128xi32>
    %c32_i32_86 = arith.constant 32 : i32
    %179 = vector.broadcast %c32_i32_86 : i32 to vector<2x128xi32>
    %180 = arith.cmpi slt, %178, %179 : vector<2x128xi32>
    %181 = arith.extui %180 : vector<2x128xi1> to vector<2x128xi32>
    %182 = arith.sitofp %181 : vector<2x128xi32> to vector<2x128xf32>
    %183 = arith.mulf %173, %182 : vector<2x128xf32>
    %c0_87 = arith.constant 0 : index
    %c0_88 = arith.constant 0 : index
    %184 = vector.load %arg7[%c0_87, %c0_88] : memref<2x128xf32, #tpu.memory_space<vmem>>, vector<2x128xf32>
    tpu.vector_store %arg7[%c0_87, %c0_88], %183 {strides = array<i32>} : memref<2x128xf32, #tpu.memory_space<vmem>>, vector<2x128xf32>,
    %185 = arith.mulf %171, %182 : vector<2x128xf32>
    %c0_89 = arith.constant 0 : index
    %c0_90 = arith.constant 0 : index
    %186 = vector.load %arg8[%c0_89, %c0_90] : memref<2x128xf32, #tpu.memory_space<vmem>>, vector<2x128xf32>
    tpu.vector_store %arg8[%c0_89, %c0_90], %185 {strides = array<i32>} : memref<2x128xf32, #tpu.memory_space<vmem>>, vector<2x128xf32>,
    %c0_91 = arith.constant 0 : index
    %c0_92 = arith.constant 0 : index
    %187 = vector.load %arg9[%c0_91, %c0_92] : memref<16x128xf32, #tpu.memory_space<vmem>>, vector<16x128xf32>
    %c0_93 = arith.constant 0 : index
    %c0_94 = arith.constant 0 : index
    %188 = vector.load %arg2[%c0_93, %c0_94] : memref<128x128xf32, #tpu.memory_space<vmem>>, vector<128x128xf32>
    %cst_95 = arith.constant dense<0.000000e+00> : vector<16x128xf32>
    %189 = tpu.matmul %187, %188, %cst_95 {dimension_numbers = #tpu.dot_dimension_numbers<[1], [0], [0], [1], [0, 0, 1, 1], [], []>} : vector<16x128xf32>, vector<128x128xf32>, vector<16x128xf32> -> vector<16x128xf32>
    %c0_96 = arith.constant 0 : index
    %c0_97 = arith.constant 0 : index
    %190 = vector.load %arg3[%c0_96, %c0_97] : memref<1x128xf32, #tpu.memory_space<vmem>>, vector<1x128xf32>
    %191 = vector.broadcast %190 : vector<1x128xf32> to vector<16x128xf32>
    %192 = arith.addf %189, %191 : vector<16x128xf32>
    %cst_98 = arith.constant dense<0.000000e+00> : vector<128xf32>
    %193 = vector.multi_reduction <add>, %192, %cst_98 [0] : vector<16x128xf32> to vector<128xf32>
    %194 = vector.shape_cast %193 : vector<128xf32> to vector<1x128xf32>
    %cst_99 = arith.constant 1.600000e+01 : f32
    %195 = vector.broadcast %cst_99 : f32 to vector<1x128xf32>
    %196 = arith.divf %194, %195 : vector<1x128xf32>
    %197 = vector.broadcast %196 : vector<1x128xf32> to vector<16x128xf32>
    %198 = arith.subf %192, %197 : vector<16x128xf32>
    %199 = arith.mulf %198, %198 : vector<16x128xf32>
    %cst_100 = arith.constant dense<0.000000e+00> : vector<128xf32>
    %200 = vector.multi_reduction <add>, %199, %cst_100 [0] : vector<16x128xf32> to vector<128xf32>
    %201 = vector.shape_cast %200 : vector<128xf32> to vector<1x128xf32>
    %cst_101 = arith.constant 1.600000e+01 : f32
    %202 = vector.broadcast %cst_101 : f32 to vector<1x128xf32>
    %203 = arith.divf %201, %202 : vector<1x128xf32>
    %204 = vector.broadcast %196 : vector<1x128xf32> to vector<16x128xf32>
    %205 = arith.subf %192, %204 : vector<16x128xf32>
    %cst_102 = arith.constant 9.99999974E-6 : f32
    %206 = vector.broadcast %cst_102 : f32 to vector<1x128xf32>
    %207 = arith.addf %203, %206 : vector<1x128xf32>
    %208 = math.rsqrt %207 : vector<1x128xf32>
    %209 = vector.broadcast %208 : vector<1x128xf32> to vector<16x128xf32>
    %210 = arith.mulf %205, %209 : vector<16x128xf32>
    %c0_103 = arith.constant 0 : index
    %c0_104 = arith.constant 0 : index
    %211 = vector.load %arg4[%c0_103, %c0_104] : memref<1x128xf32, #tpu.memory_space<vmem>>, vector<1x128xf32>
    %212 = vector.broadcast %211 : vector<1x128xf32> to vector<16x128xf32>
    %213 = arith.mulf %210, %212 : vector<16x128xf32>
    %c0_105 = arith.constant 0 : index
    %c0_106 = arith.constant 0 : index
    %214 = vector.load %arg5[%c0_105, %c0_106] : memref<1x128xf32, #tpu.memory_space<vmem>>, vector<1x128xf32>
    %215 = vector.broadcast %214 : vector<1x128xf32> to vector<16x128xf32>
    %216 = arith.addf %213, %215 : vector<16x128xf32>
    %c0_107 = arith.constant 0 : index
    %c0_108 = arith.constant 0 : index
    %217 = vector.load %arg6[%c0_107, %c0_108] : memref<16x128xf32, #tpu.memory_space<vmem>>, vector<16x128xf32>
    tpu.vector_store %arg6[%c0_107, %c0_108], %216 {strides = array<i32>} : memref<16x128xf32, #tpu.memory_space<vmem>>, vector<16x128xf32>,
    return
  }
}

</mosaic_0001>

<llo_original>
// kernel: tpu_custom_call.1
$region0: #{tpu_custom_call.1}
  #allocation0 [shape = 'u32[]', space=smem, size = 0x4, offset = 0x4, fixed_abs, tag = 'smem constant byte address 0x4 - core index']
  #allocation1 [shape = 'u32[144,128]{1,0:T(1,128)}', space=vmem, size = 0x12000, scoped, tag = 'internal scratch']
  #allocation2 [shape = 'f32[16,128]{1,0:T(8,128)}', space=vmem, size = 0x2000, scoped, tag = 'scratch operand']
  %s0 = inlined_call_operand.hbm [shape: f32[16,128], index: 0, kind: input, shape index: {}]
  %s1 = inlined_call_operand.hbm [shape: f32[128,128], index: 1, kind: input, shape index: {}]
  %s2 = inlined_call_operand.hbm [shape: f32[128,128], index: 2, kind: input, shape index: {}]
  %s3 = inlined_call_operand.vmem [shape: f32[1,128], index: 3, kind: input, shape index: {}]
  %s4 = inlined_call_operand.vmem [shape: f32[1,128], index: 4, kind: input, shape index: {}]
  %s5 = inlined_call_operand.vmem [shape: f32[1,128], index: 5, kind: input, shape index: {}]
  %s6 = inlined_call_operand.hbm [shape: f32[16,128], index: 6, kind: output, shape index: {0}]
  %s7 = inlined_call_operand.hbm [shape: f32[2,128], index: 7, kind: output, shape index: {1}]
  %s8 = inlined_call_operand.hbm [shape: f32[2,128], index: 8, kind: output, shape index: {2}]
  %9 = xla_tuple %s6, %s7, %s8
  %s10 = sld [smem:[#allocation0]]
  $region62: #{tpu_custom_call.1} parent=0
    _
  %s12 = ssub.s32 1, %s10
  %s13 = scalar_select 0, %s12, %s10
  $region1: #{tpu_custom_call.1} parent=0
    #allocation3 [shape = 'u8[8192]{0}', space=vmem, size = 0x2000, scoped, tag = 'input window, operand 0, single buffered']
    #allocation4 [shape = 's32[1]{0}', space=sflag, size = 0x4, scoped, tag = 'scoped memory for tpu_custom_call.1']
    #allocation5 [shape = 's32[1]{0}', space=sflag, size = 0x4, scoped, tag = 'scoped memory for tpu_custom_call.1']
    #allocation6 [shape = 'u8[65536]{0}', space=vmem, size = 0x10000, scoped, tag = 'input window, operand 1, single buffered']
    #allocation7 [shape = 's32[1]{0}', space=sflag, size = 0x4, scoped, tag = 'scoped memory for tpu_custom_call.1']
    #allocation8 [shape = 'u8[65536]{0}', space=vmem, size = 0x10000, scoped, tag = 'input window, operand 2, single buffered']
    #allocation9 [shape = 'u8[8192]{0}', space=vmem, size = 0x2000, scoped, tag = 'output window, operand 0, single buffered']
    #allocation10 [shape = 'u8[1024]{0}', space=vmem, size = 0x400, scoped, tag = 'output window, operand 1, single buffered']
    #allocation11 [shape = 's32[1]{0}', space=sflag, size = 0x4, scoped, tag = 'scoped memory for tpu_custom_call.1']
    #allocation12 [shape = 'u8[1024]{0}', space=vmem, size = 0x400, scoped, tag = 'output window, operand 2, single buffered']
    %14 = vsyncpa [#allocation4], 0
    %15 = vsyncpa [#allocation7], 0
    %16 = vsyncpa [#allocation5], 0
    %17 = vsyncpa [#allocation11], 0
    // Predicated region
    $region2: #{tpu_custom_call.1} parent=1 // pred_check
      _
    $region3: #{tpu_custom_call.1} parent=1 // pred_check_branch
      %19 = sbr.rel (0) target = $region5
    $region4: #{tpu_custom_call.1} parent=1 // pred_region
      %s21 = ssub.s32 256, 256
      %22 = vsyncadd [#allocation4], %s21
      %s23 = sshll.u32 [#allocation3], 4
      %s24 = int_to_ptr.vmem [resolvable:$true] %s23
      %29 = dma.hbm_to_vmem [thread:$0]  %s0, 256, %s24, [#allocation4], 128, 128, 8
    $region5: #{tpu_custom_call.1} parent=1 // pred_fallthru
      _
    // Predicated region
    $region6: #{tpu_custom_call.1} parent=1 // pred_check
      _
    $region7: #{tpu_custom_call.1} parent=1 // pred_check_branch
      %31 = sbr.rel (0) target = $region9
    $region8: #{tpu_custom_call.1} parent=1 // pred_region
      %s33 = ssub.s32 2048, 2048
      %34 = vsyncadd [#allocation7], %s33
      %s35 = sshll.u32 [#allocation6], 4
      %s36 = int_to_ptr.vmem [resolvable:$true] %s35
      %41 = dma.hbm_to_vmem [thread:$0]  %s1, 2048, %s36, [#allocation7], 128, 128, 8
    $region9: #{tpu_custom_call.1} parent=1 // pred_fallthru
      _
    // Predicated region
    $region10: #{tpu_custom_call.1} parent=1 // pred_check
      _
    $region11: #{tpu_custom_call.1} parent=1 // pred_check_branch
      %43 = sbr.rel (0) target = $region13
    $region12: #{tpu_custom_call.1} parent=1 // pred_region
      %s45 = ssub.s32 2048, 2048
      %46 = vsyncadd [#allocation7], %s45
      %s47 = sshll.u32 [#allocation8], 4
      %s48 = int_to_ptr.vmem [resolvable:$true] %s47
      %53 = dma.hbm_to_vmem [thread:$0]  %s2, 2048, %s48, [#allocation7], 128, 128, 8
    $region13: #{tpu_custom_call.1} parent=1 // pred_fallthru
      _
    // Predicated region
    $region14: #{tpu_custom_call.1} parent=1 // pred_check
      _
    $region15: #{tpu_custom_call.1} parent=1 // pred_check_branch
      %55 = sbr.rel (0) target = $region17
    $region16: #{tpu_custom_call.1} parent=1 // pred_region
      _
    $region17: #{tpu_custom_call.1} parent=1 // pred_fallthru
      _
    // Predicated region
    $region18: #{tpu_custom_call.1} parent=1 // pred_check
      _
    $region19: #{tpu_custom_call.1} parent=1 // pred_check_branch
      %57 = sbr.rel (0) target = $region21
    $region20: #{tpu_custom_call.1} parent=1 // pred_region
      _
    $region21: #{tpu_custom_call.1} parent=1 // pred_fallthru
      _
    // Predicated region
    $region22: #{tpu_custom_call.1} parent=1 // pred_check
      _
    $region23: #{tpu_custom_call.1} parent=1 // pred_check_branch
      %59 = sbr.rel (0) target = $region25
    $region24: #{tpu_custom_call.1} parent=1 // pred_region
      _
    $region25: #{tpu_custom_call.1} parent=1 // pred_fallthru
      _
    // Predicated region
    $region26: #{tpu_custom_call.1} parent=1 // pred_check
      _
    $region27: #{tpu_custom_call.1} parent=1 // pred_check_branch
      %61 = sbr.rel (0) target = $region29
    $region28: #{tpu_custom_call.1} parent=1 // pred_region
      %62 = dma.done [#allocation4], 256
    $region29: #{tpu_custom_call.1} parent=1 // pred_fallthru
      _
    // Predicated region
    $region30: #{tpu_custom_call.1} parent=1 // pred_check
      _
    $region31: #{tpu_custom_call.1} parent=1 // pred_check_branch
      %64 = sbr.rel (0) target = $region33
    $region32: #{tpu_custom_call.1} parent=1 // pred_region
      %65 = dma.done [#allocation7], 2048
    $region33: #{tpu_custom_call.1} parent=1 // pred_fallthru
      _
    // Predicated region
    $region34: #{tpu_custom_call.1} parent=1 // pred_check
      _
    $region35: #{tpu_custom_call.1} parent=1 // pred_check_branch
      %67 = sbr.rel (0) target = $region37
    $region36: #{tpu_custom_call.1} parent=1 // pred_region
      %68 = dma.done [#allocation7], 2048
    $region37: #{tpu_custom_call.1} parent=1 // pred_fallthru
      _
    %v69 = vld [vmem:[#allocation3] sm:$0x3]
    %v70 = vld [vmem:[#allocation6] sm:$0xff]
    %v71 = vld [vmem:[#allocation6 + $0x8] sm:$0xff]
    %v72 = vld [vmem:[#allocation6 + $0x10] sm:$0xff]
    %v73 = vld [vmem:[#allocation6 + $0x18] sm:$0xff]
    %v74 = vld [vmem:[#allocation6 + $0x20] sm:$0xff]
    %v75 = vld [vmem:[#allocation6 + $0x28] sm:$0xff]
    %v76 = vld [vmem:[#allocation6 + $0x30] sm:$0xff]
    %v77 = vld [vmem:[#allocation6 + $0x38] sm:$0xff]
    %v78 = vld [vmem:[#allocation6 + $0x40] sm:$0xff]
    %v79 = vld [vmem:[#allocation6 + $0x48] sm:$0xff]
    %v80 = vld [vmem:[#allocation6 + $0x50] sm:$0xff]
    %v81 = vld [vmem:[#allocation6 + $0x58] sm:$0xff]
    %v82 = vld [vmem:[#allocation6 + $0x60] sm:$0xff]
    %v83 = vld [vmem:[#allocation6 + $0x68] sm:$0xff]
    %v84 = vld [vmem:[#allocation6 + $0x70] sm:$0xff]
    %v85 = vld [vmem:[#allocation6 + $0x78] sm:$0xff]
    %86 = vmatprep.subr.mxu0 0.0
    %87 = vmatpush1.msra.mxu0 %v85
    %88 = vmatprep.subr.mxu0 0.0
    %89 = vmatpush1.msra.mxu0 %v84
    %90 = vmatprep.subr.mxu0 0.0
    %91 = vmatpush1.msra.mxu0 %v83
    %92 = vmatprep.subr.mxu0 0.0
    %93 = vmatpush1.msra.mxu0 %v82
    %94 = vmatprep.subr.mxu0 0.0
    %95 = vmatpush1.msra.mxu0 %v81
    %96 = vmatprep.subr.mxu0 0.0
    %97 = vmatpush1.msra.mxu0 %v80
    %98 = vmatprep.subr.mxu0 0.0
    %99 = vmatpush1.msra.mxu0 %v79
    %100 = vmatprep.subr.mxu0 0.0
    %101 = vmatpush1.msra.mxu0 %v78
    %102 = vmatprep.subr.mxu0 0.0
    %103 = vmatpush1.msra.mxu0 %v77
    %104 = vmatprep.subr.mxu0 0.0
    %105 = vmatpush1.msra.mxu0 %v76
    %106 = vmatprep.subr.mxu0 0.0
    %107 = vmatpush1.msra.mxu0 %v75
    %108 = vmatprep.subr.mxu0 0.0
    %109 = vmatpush1.msra.mxu0 %v74
    %110 = vmatprep.subr.mxu0 0.0
    %111 = vmatpush1.msra.mxu0 %v73
    %112 = vmatprep.subr.mxu0 0.0
    %113 = vmatpush1.msra.mxu0 %v72
    %114 = vmatprep.subr.mxu0 0.0
    %115 = vmatpush1.msra.mxu0 %v71
    %116 = vmatprep.subr.mxu0 0.0
    %117 = vmatpush1.msra.mxu0 %v70
    %118 = vmatprep.subr.mxu0 0.0
    %119 = vmatpush2.msra.mxu0 0.0
    %120 = vmatprep.subr.mxu0 0.0
    %121 = vmatpush2.msra.mxu0 0.0
    %122 = vmatprep.subr.mxu0 0.0
    %123 = vmatpush2.msra.mxu0 0.0
    %124 = vmatprep.subr.mxu0 0.0
    %125 = vmatpush2.msra.mxu0 0.0
    %126 = vmatprep.subr.mxu0 0.0
    %127 = vmatpush2.msra.mxu0 0.0
    %128 = vmatprep.subr.mxu0 0.0
    %129 = vmatpush2.msra.mxu0 0.0
    %130 = vmatprep.subr.mxu0 0.0
    %131 = vmatpush2.msra.mxu0 0.0
    %132 = vmatprep.subr.mxu0 0.0
    %133 = vmatpush2.msra.mxu0 0.0
    %134 = vmatprep.subr.mxu0 0.0
    %135 = vmatpush2.msra.mxu0 0.0
    %136 = vmatprep.subr.mxu0 0.0
    %137 = vmatpush2.msra.mxu0 0.0
    %138 = vmatprep.subr.mxu0 0.0
    %139 = vmatpush2.msra.mxu0 0.0
    %140 = vmatprep.subr.mxu0 0.0
    %141 = vmatpush2.msra.mxu0 0.0
    %142 = vmatprep.subr.mxu0 0.0
    %143 = vmatpush2.msra.mxu0 0.0
    %144 = vmatprep.subr.mxu0 0.0
    %145 = vmatpush2.msra.mxu0 0.0
    %146 = vmatprep.subr.mxu0 0.0
    %147 = vmatpush2.msra.mxu0 0.0
    %148 = vmatprep.subr.mxu0 0.0
    %149 = vmatpush2.msra.mxu0 0.0
    %150 = vmatprep.mubr.f32.mxu0 0.0
    %151 = vmatmul.mubr.f32.gmra.mxu0 0.0
    %v152 = vpop.f32.mrf.mxu0
    %v153 = vadd.f32 0.0, %v152
    %v154 = vpop.f32.mrf.mxu0
    %155 = vdwg.mxu0
    %v156 = vadd.f32 %v69, %v153
    %v157 = vxor.u32 %v156, 2147483648
    %v158 = vmul.f32 %v157, 1.442695
    %v159 = vpow.pop %v158
    %v160 = vadd.f32 %v159, 1.0
    %v161 = vrcp.pop %v160
    %v162 = vmul.f32 1.0, %v161
    %v163 = vtanh.pop %v156
    %164 = vrot.lane.b32.xlu0 %v162, 96
    %v165 = vpop.permute.xlu0 %164
    %166 = vrot.lane.b32.xlu0 %v163, 64
    %v167 = vpop.permute.xlu0 %166
    %168 = vrot.lane.b32.xlu0 %v162, 32
    %v169 = vpop.permute.xlu0 %168
    %v170 = vmul.f32 %v165, 0.0
    %v171 = vmul.f32 %v162, %v167
    %v172 = vadd.f32 %v170, %v171
    %v173 = vtanh.pop %v172
    %v174 = vmul.f32 %v169, %v173
    %175 = vst [vmem:[#allocation2] sm:$0x1] %v174
    %176 = vst [vmem:[#allocation2 + $0x7] sm:$0x2] %v174
    %v177 = vld [vmem:[#allocation3 + $0x2] sm:$0x3]
    %v178 = vld [vmem:[#allocation6] sm:$0xff]
    %v179 = vld [vmem:[#allocation6 + $0x8] sm:$0xff]
    %v180 = vld [vmem:[#allocation6 + $0x10] sm:$0xff]
    %v181 = vld [vmem:[#allocation6 + $0x18] sm:$0xff]
    %v182 = vld [vmem:[#allocation6 + $0x20] sm:$0xff]
    %v183 = vld [vmem:[#allocation6 + $0x28] sm:$0xff]
    %v184 = vld [vmem:[#allocation6 + $0x30] sm:$0xff]
    %v185 = vld [vmem:[#allocation6 + $0x38] sm:$0xff]
    %v186 = vld [vmem:[#allocation6 + $0x40] sm:$0xff]
    %v187 = vld [vmem:[#allocation6 + $0x48] sm:$0xff]
    %v188 = vld [vmem:[#allocation6 + $0x50] sm:$0xff]
    %v189 = vld [vmem:[#allocation6 + $0x58] sm:$0xff]
    %v190 = vld [vmem:[#allocation6 + $0x60] sm:$0xff]
    %v191 = vld [vmem:[#allocation6 + $0x68] sm:$0xff]
    %v192 = vld [vmem:[#allocation6 + $0x70] sm:$0xff]
    %v193 = vld [vmem:[#allocation6 + $0x78] sm:$0xff]
    %194 = vmatprep.subr.mxu0 0.0
    %195 = vmatpush1.msra.mxu0 %v193
    %196 = vmatprep.subr.mxu0 0.0
    %197 = vmatpush1.msra.mxu0 %v192
    %198 = vmatprep.subr.mxu0 0.0
    %199 = vmatpush1.msra.mxu0 %v191
    %200 = vmatprep.subr.mxu0 0.0
    %201 = vmatpush1.msra.mxu0 %v190
    %202 = vmatprep.subr.mxu0 0.0
    %203 = vmatpush1.msra.mxu0 %v189
    %204 = vmatprep.subr.mxu0 0.0
    %205 = vmatpush1.msra.mxu0 %v188
    %206 = vmatprep.subr.mxu0 0.0
    %207 = vmatpush1.msra.mxu0 %v187
    %208 = vmatprep.subr.mxu0 0.0
    %209 = vmatpush1.msra.mxu0 %v186
    %210 = vmatprep.subr.mxu0 0.0
    %211 = vmatpush1.msra.mxu0 %v185
    %212 = vmatprep.subr.mxu0 0.0
    %213 = vmatpush1.msra.mxu0 %v184
    %214 = vmatprep.subr.mxu0 0.0
    %215 = vmatpush1.msra.mxu0 %v183
    %216 = vmatprep.subr.mxu0 0.0
    %217 = vmatpush1.msra.mxu0 %v182
    %218 = vmatprep.subr.mxu0 0.0
    %219 = vmatpush1.msra.mxu0 %v181
    %220 = vmatprep.subr.mxu0 0.0
    %221 = vmatpush1.msra.mxu0 %v180
    %222 = vmatprep.subr.mxu0 0.0
    %223 = vmatpush1.msra.mxu0 %v179
    %224 = vmatprep.subr.mxu0 0.0
    %225 = vmatpush1.msra.mxu0 %v178
    %226 = vmatprep.subr.mxu0 0.0
    %227 = vmatpush2.msra.mxu0 0.0
    %228 = vmatprep.subr.mxu0 0.0
    %229 = vmatpush2.msra.mxu0 0.0
    %230 = vmatprep.subr.mxu0 0.0
    %231 = vmatpush2.msra.mxu0 0.0
    %232 = vmatprep.subr.mxu0 0.0
    %233 = vmatpush2.msra.mxu0 0.0
    %234 = vmatprep.subr.mxu0 0.0
    %235 = vmatpush2.msra.mxu0 0.0
    %236 = vmatprep.subr.mxu0 0.0
    %237 = vmatpush2.msra.mxu0 0.0
    %238 = vmatprep.subr.mxu0 0.0
    %239 = vmatpush2.msra.mxu0 0.0
    %240 = vmatprep.subr.mxu0 0.0
    %241 = vmatpush2.msra.mxu0 0.0
    %242 = vmatprep.subr.mxu0 0.0
    %243 = vmatpush2.msra.mxu0 0.0
    %244 = vmatprep.subr.mxu0 0.0
    %245 = vmatpush2.msra.mxu0 0.0
    %246 = vmatprep.subr.mxu0 0.0
    %247 = vmatpush2.msra.mxu0 0.0
    %248 = vmatprep.subr.mxu0 0.0
    %249 = vmatpush2.msra.mxu0 0.0
    %250 = vmatprep.subr.mxu0 0.0
    %251 = vmatpush2.msra.mxu0 0.0
    %252 = vmatprep.subr.mxu0 0.0
    %253 = vmatpush2.msra.mxu0 0.0
    %254 = vmatprep.subr.mxu0 0.0
    %255 = vmatpush2.msra.mxu0 0.0
    %256 = vmatprep.subr.mxu0 0.0
    %257 = vmatpush2.msra.mxu0 0.0
    %258 = vmatprep.mubr.f32.mxu0 0.0
    %259 = vmatmul.mubr.f32.gmra.mxu0 %v174
    %v260 = vpop.f32.mrf.mxu0
    %v261 = vadd.f32 0.0, %v260
    %v262 = vpop.f32.mrf.mxu0
    %263 = vdwg.mxu0
    %v264 = vadd.f32 %v177, %v261
    %v265 = vxor.u32 %v264, 2147483648
    %v266 = vmul.f32 %v265, 1.442695
    %v267 = vpow.pop %v266
    %v268 = vadd.f32 %v267, 1.0
    %v269 = vrcp.pop %v268
    %v270 = vmul.f32 1.0, %v269
    %v271 = vtanh.pop %v264
    %272 = vrot.lane.b32.xlu0 %v270, 96
    %v273 = vpop.permute.xlu0 %272
    %274 = vrot.lane.b32.xlu0 %v271, 64
    %v275 = vpop.permute.xlu0 %274
    %276 = vrot.lane.b32.xlu0 %v270, 32
    %v277 = vpop.permute.xlu0 %276
    %v278 = vmul.f32 %v273, %v172
    %v279 = vmul.f32 %v270, %v275
    %v280 = vadd.f32 %v278, %v279
    %v281 = vtanh.pop %v280
    %v282 = vmul.f32 %v277, %v281
    %283 = vst [vmem:[#allocation2 + $0x1] sm:$0x1] %v282
    %284 = vst [vmem:[#allocation2 + $0x8] sm:$0x2] %v282
    %v285 = vld [vmem:[#allocation3 + $0x4] sm:$0x3]
    %v286 = vld [vmem:[#allocation6] sm:$0xff]
    %v287 = vld [vmem:[#allocation6 + $0x8] sm:$0xff]
    %v288 = vld [vmem:[#allocation6 + $0x10] sm:$0xff]
    %v289 = vld [vmem:[#allocation6 + $0x18] sm:$0xff]
    %v290 = vld [vmem:[#allocation6 + $0x20] sm:$0xff]
    %v291 = vld [vmem:[#allocation6 + $0x28] sm:$0xff]
    %v292 = vld [vmem:[#allocation6 + $0x30] sm:$0xff]
    %v293 = vld [vmem:[#allocation6 + $0x38] sm:$0xff]
    %v294 = vld [vmem:[#allocation6 + $0x40] sm:$0xff]
    %v295 = vld [vmem:[#allocation6 + $0x48] sm:$0xff]
    %v296 = vld [vmem:[#allocation6 + $0x50] sm:$0xff]
    %v297 = vld [vmem:[#allocation6 + $0x58] sm:$0xff]
    %v298 = vld [vmem:[#allocation6 + $0x60] sm:$0xff]
    %v299 = vld [vmem:[#allocation6 + $0x68] sm:$0xff]
    %v300 = vld [vmem:[#allocation6 + $0x70] sm:$0xff]
    %v301 = vld [vmem:[#allocation6 + $0x78] sm:$0xff]
    %302 = vmatprep.subr.mxu0 0.0
    %303 = vmatpush1.msra.mxu0 %v301
    %304 = vmatprep.subr.mxu0 0.0
    %305 = vmatpush1.msra.mxu0 %v300
    %306 = vmatprep.subr.mxu0 0.0
    %307 = vmatpush1.msra.mxu0 %v299
    %308 = vmatprep.subr.mxu0 0.0
    %309 = vmatpush1.msra.mxu0 %v298
    %310 = vmatprep.subr.mxu0 0.0
    %311 = vmatpush1.msra.mxu0 %v297
    %312 = vmatprep.subr.mxu0 0.0
    %313 = vmatpush1.msra.mxu0 %v296
    %314 = vmatprep.subr.mxu0 0.0
    %315 = vmatpush1.msra.mxu0 %v295
    %316 = vmatprep.subr.mxu0 0.0
    %317 = vmatpush1.msra.mxu0 %v294
    %318 = vmatprep.subr.mxu0 0.0
    %319 = vmatpush1.msra.mxu0 %v293
    %320 = vmatprep.subr.mxu0 0.0
    %321 = vmatpush1.msra.mxu0 %v292
    %322 = vmatprep.subr.mxu0 0.0
    %323 = vmatpush1.msra.mxu0 %v291
    %324 = vmatprep.subr.mxu0 0.0
    %325 = vmatpush1.msra.mxu0 %v290
    %326 = vmatprep.subr.mxu0 0.0
    %327 = vmatpush1.msra.mxu0 %v289
    %328 = vmatprep.subr.mxu0 0.0
    %329 = vmatpush1.msra.mxu0 %v288
    %330 = vmatprep.subr.mxu0 0.0
    %331 = vmatpush1.msra.mxu0 %v287
    %332 = vmatprep.subr.mxu0 0.0
    %333 = vmatpush1.msra.mxu0 %v286
    %334 = vmatprep.subr.mxu0 0.0
    %335 = vmatpush2.msra.mxu0 0.0
    %336 = vmatprep.subr.mxu0 0.0
    %337 = vmatpush2.msra.mxu0 0.0
    %338 = vmatprep.subr.mxu0 0.0
    %339 = vmatpush2.msra.mxu0 0.0
    %340 = vmatprep.subr.mxu0 0.0
    %341 = vmatpush2.msra.mxu0 0.0
    %342 = vmatprep.subr.mxu0 0.0
    %343 = vmatpush2.msra.mxu0 0.0
    %344 = vmatprep.subr.mxu0 0.0
    %345 = vmatpush2.msra.mxu0 0.0
    %346 = vmatprep.subr.mxu0 0.0
    %347 = vmatpush2.msra.mxu0 0.0
    %348 = vmatprep.subr.mxu0 0.0
    %349 = vmatpush2.msra.mxu0 0.0
    %350 = vmatprep.subr.mxu0 0.0
    %351 = vmatpush2.msra.mxu0 0.0
    %352 = vmatprep.subr.mxu0 0.0
    %353 = vmatpush2.msra.mxu0 0.0
    %354 = vmatprep.subr.mxu0 0.0
    %355 = vmatpush2.msra.mxu0 0.0
    %356 = vmatprep.subr.mxu0 0.0
    %357 = vmatpush2.msra.mxu0 0.0
    %358 = vmatprep.subr.mxu0 0.0
    %359 = vmatpush2.msra.mxu0 0.0
    %360 = vmatprep.subr.mxu0 0.0
    %361 = vmatpush2.msra.mxu0 0.0
    %362 = vmatprep.subr.mxu0 0.0
    %363 = vmatpush2.msra.mxu0 0.0
    %364 = vmatprep.subr.mxu0 0.0
    %365 = vmatpush2.msra.mxu0 0.0
    %366 = vmatprep.mubr.f32.mxu0 0.0
    %367 = vmatmul.mubr.f32.gmra.mxu0 %v282
    %v368 = vpop.f32.mrf.mxu0
    %v369 = vadd.f32 0.0, %v368
    %v370 = vpop.f32.mrf.mxu0
    %371 = vdwg.mxu0
    %v372 = vadd.f32 %v285, %v369
    %v373 = vxor.u32 %v372, 2147483648
    %v374 = vmul.f32 %v373, 1.442695
    %v375 = vpow.pop %v374
    %v376 = vadd.f32 %v375, 1.0
    %v377 = vrcp.pop %v376
    %v378 = vmul.f32 1.0, %v377
    %v379 = vtanh.pop %v372
    %380 = vrot.lane.b32.xlu0 %v378, 96
    %v381 = vpop.permute.xlu0 %380
    %382 = vrot.lane.b32.xlu0 %v379, 64
    %v383 = vpop.permute.xlu0 %382
    %384 = vrot.lane.b32.xlu0 %v378, 32
    %v385 = vpop.permute.xlu0 %384
    %v386 = vmul.f32 %v381, %v280
    %v387 = vmul.f32 %v378, %v383
    %v388 = vadd.f32 %v386, %v387
    %v389 = vtanh.pop %v388
    %v390 = vmul.f32 %v385, %v389
    %391 = vst [vmem:[#allocation2 + $0x2] sm:$0x1] %v390
    %392 = vst [vmem:[#allocation2 + $0x9] sm:$0x2] %v390
    %v393 = vld [vmem:[#allocation3 + $0x6] sm:$0x3]
    %v394 = vld [vmem:[#allocation6] sm:$0xff]
    %v395 = vld [vmem:[#allocation6 + $0x8] sm:$0xff]
    %v396 = vld [vmem:[#allocation6 + $0x10] sm:$0xff]
    %v397 = vld [vmem:[#allocation6 + $0x18] sm:$0xff]
    %v398 = vld [vmem:[#allocation6 + $0x20] sm:$0xff]
    %v399 = vld [vmem:[#allocation6 + $0x28] sm:$0xff]
    %v400 = vld [vmem:[#allocation6 + $0x30] sm:$0xff]
    %v401 = vld [vmem:[#allocation6 + $0x38] sm:$0xff]
    %v402 = vld [vmem:[#allocation6 + $0x40] sm:$0xff]
    %v403 = vld [vmem:[#allocation6 + $0x48] sm:$0xff]
    %v404 = vld [vmem:[#allocation6 + $0x50] sm:$0xff]
    %v405 = vld [vmem:[#allocation6 + $0x58] sm:$0xff]
    %v406 = vld [vmem:[#allocation6 + $0x60] sm:$0xff]
    %v407 = vld [vmem:[#allocation6 + $0x68] sm:$0xff]
    %v408 = vld [vmem:[#allocation6 + $0x70] sm:$0xff]
    %v409 = vld [vmem:[#allocation6 + $0x78] sm:$0xff]
    %410 = vmatprep.subr.mxu0 0.0
    %411 = vmatpush1.msra.mxu0 %v409
    %412 = vmatprep.subr.mxu0 0.0
    %413 = vmatpush1.msra.mxu0 %v408
    %414 = vmatprep.subr.mxu0 0.0
    %415 = vmatpush1.msra.mxu0 %v407
    %416 = vmatprep.subr.mxu0 0.0
    %417 = vmatpush1.msra.mxu0 %v406
    %418 = vmatprep.subr.mxu0 0.0
    %419 = vmatpush1.msra.mxu0 %v405
    %420 = vmatprep.subr.mxu0 0.0
    %421 = vmatpush1.msra.mxu0 %v404
    %422 = vmatprep.subr.mxu0 0.0
    %423 = vmatpush1.msra.mxu0 %v403
    %424 = vmatprep.subr.mxu0 0.0
    %425 = vmatpush1.msra.mxu0 %v402
    %426 = vmatprep.subr.mxu0 0.0
    %427 = vmatpush1.msra.mxu0 %v401
    %428 = vmatprep.subr.mxu0 0.0
    %429 = vmatpush1.msra.mxu0 %v400
    %430 = vmatprep.subr.mxu0 0.0
    %431 = vmatpush1.msra.mxu0 %v399
    %432 = vmatprep.subr.mxu0 0.0
    %433 = vmatpush1.msra.mxu0 %v398
    %434 = vmatprep.subr.mxu0 0.0
    %435 = vmatpush1.msra.mxu0 %v397
    %436 = vmatprep.subr.mxu0 0.0
    %437 = vmatpush1.msra.mxu0 %v396
    %438 = vmatprep.subr.mxu0 0.0
    %439 = vmatpush1.msra.mxu0 %v395
    %440 = vmatprep.subr.mxu0 0.0
    %441 = vmatpush1.msra.mxu0 %v394
    %442 = vmatprep.subr.mxu0 0.0
    %443 = vmatpush2.msra.mxu0 0.0
    %444 = vmatprep.subr.mxu0 0.0
    %445 = vmatpush2.msra.mxu0 0.0
    %446 = vmatprep.subr.mxu0 0.0
    %447 = vmatpush2.msra.mxu0 0.0
    %448 = vmatprep.subr.mxu0 0.0
    %449 = vmatpush2.msra.mxu0 0.0
    %450 = vmatprep.subr.mxu0 0.0
    %451 = vmatpush2.msra.mxu0 0.0
    %452 = vmatprep.subr.mxu0 0.0
    %453 = vmatpush2.msra.mxu0 0.0
    %454 = vmatprep.subr.mxu0 0.0
    %455 = vmatpush2.msra.mxu0 0.0
    %456 = vmatprep.subr.mxu0 0.0
    %457 = vmatpush2.msra.mxu0 0.0
    %458 = vmatprep.subr.mxu0 0.0
    %459 = vmatpush2.msra.mxu0 0.0
    %460 = vmatprep.subr.mxu0 0.0
    %461 = vmatpush2.msra.mxu0 0.0
    %462 = vmatprep.subr.mxu0 0.0
    %463 = vmatpush2.msra.mxu0 0.0
    %464 = vmatprep.subr.mxu0 0.0
    %465 = vmatpush2.msra.mxu0 0.0
    %466 = vmatprep.subr.mxu0 0.0
    %467 = vmatpush2.msra.mxu0 0.0
    %468 = vmatprep.subr.mxu0 0.0
    %469 = vmatpush2.msra.mxu0 0.0
    %470 = vmatprep.subr.mxu0 0.0
    %471 = vmatpush2.msra.mxu0 0.0
    %472 = vmatprep.subr.mxu0 0.0
    %473 = vmatpush2.msra.mxu0 0.0
    %474 = vmatprep.mubr.f32.mxu0 0.0
    %475 = vmatmul.mubr.f32.gmra.mxu0 %v390
    %v476 = vpop.f32.mrf.mxu0
    %v477 = vadd.f32 0.0, %v476
    %v478 = vpop.f32.mrf.mxu0
    %479 = vdwg.mxu0
    %v480 = vadd.f32 %v393, %v477
    %v481 = vxor.u32 %v480, 2147483648
    %v482 = vmul.f32 %v481, 1.442695
    %v483 = vpow.pop %v482
    %v484 = vadd.f32 %v483, 1.0
    %v485 = vrcp.pop %v484
    %v486 = vmul.f32 1.0, %v485
    %v487 = vtanh.pop %v480
    %488 = vrot.lane.b32.xlu0 %v486, 96
    %v489 = vpop.permute.xlu0 %488
    %490 = vrot.lane.b32.xlu0 %v487, 64
    %v491 = vpop.permute.xlu0 %490
    %492 = vrot.lane.b32.xlu0 %v486, 32
    %v493 = vpop.permute.xlu0 %492
    %v494 = vmul.f32 %v489, %v388
    %v495 = vmul.f32 %v486, %v491
    %v496 = vadd.f32 %v494, %v495
    %v497 = vtanh.pop %v496
    %v498 = vmul.f32 %v493, %v497
    %499 = vst [vmem:[#allocation2 + $0x3] sm:$0x1] %v498
    %500 = vst [vmem:[#allocation2 + $0xa] sm:$0x2] %v498
    %v501 = vld [vmem:[#allocation3 + $0x8] sm:$0x3]
    %v502 = vld [vmem:[#allocation6] sm:$0xff]
    %v503 = vld [vmem:[#allocation6 + $0x8] sm:$0xff]
    %v504 = vld [vmem:[#allocation6 + $0x10] sm:$0xff]
    %v505 = vld [vmem:[#allocation6 + $0x18] sm:$0xff]
    %v506 = vld [vmem:[#allocation6 + $0x20] sm:$0xff]
    %v507 = vld [vmem:[#allocation6 + $0x28] sm:$0xff]
    %v508 = vld [vmem:[#allocation6 + $0x30] sm:$0xff]
    %v509 = vld [vmem:[#allocation6 + $0x38] sm:$0xff]
    %v510 = vld [vmem:[#allocation6 + $0x40] sm:$0xff]
    %v511 = vld [vmem:[#allocation6 + $0x48] sm:$0xff]
    %v512 = vld [vmem:[#allocation6 + $0x50] sm:$0xff]
    %v513 = vld [vmem:[#allocation6 + $0x58] sm:$0xff]
    %v514 = vld [vmem:[#allocation6 + $0x60] sm:$0xff]
    %v515 = vld [vmem:[#allocation6 + $0x68] sm:$0xff]
    %v516 = vld [vmem:[#allocation6 + $0x70] sm:$0xff]
    %v517 = vld [vmem:[#allocation6 + $0x78] sm:$0xff]
    %518 = vmatprep.subr.mxu0 0.0
    %519 = vmatpush1.msra.mxu0 %v517
    %520 = vmatprep.subr.mxu0 0.0
    %521 = vmatpush1.msra.mxu0 %v516
    %522 = vmatprep.subr.mxu0 0.0
    %523 = vmatpush1.msra.mxu0 %v515
    %524 = vmatprep.subr.mxu0 0.0
    %525 = vmatpush1.msra.mxu0 %v514
    %526 = vmatprep.subr.mxu0 0.0
    %527 = vmatpush1.msra.mxu0 %v513
    %528 = vmatprep.subr.mxu0 0.0
    %529 = vmatpush1.msra.mxu0 %v512
    %530 = vmatprep.subr.mxu0 0.0
    %531 = vmatpush1.msra.mxu0 %v511
    %532 = vmatprep.subr.mxu0 0.0
    %533 = vmatpush1.msra.mxu0 %v510
    %534 = vmatprep.subr.mxu0 0.0
    %535 = vmatpush1.msra.mxu0 %v509
    %536 = vmatprep.subr.mxu0 0.0
    %537 = vmatpush1.msra.mxu0 %v508
    %538 = vmatprep.subr.mxu0 0.0
    %539 = vmatpush1.msra.mxu0 %v507
    %540 = vmatprep.subr.mxu0 0.0
    %541 = vmatpush1.msra.mxu0 %v506
    %542 = vmatprep.subr.mxu0 0.0
    %543 = vmatpush1.msra.mxu0 %v505
    %544 = vmatprep.subr.mxu0 0.0
    %545 = vmatpush1.msra.mxu0 %v504
    %546 = vmatprep.subr.mxu0 0.0
    %547 = vmatpush1.msra.mxu0 %v503
    %548 = vmatprep.subr.mxu0 0.0
    %549 = vmatpush1.msra.mxu0 %v502
    %550 = vmatprep.subr.mxu0 0.0
    %551 = vmatpush2.msra.mxu0 0.0
    %552 = vmatprep.subr.mxu0 0.0
    %553 = vmatpush2.msra.mxu0 0.0
    %554 = vmatprep.subr.mxu0 0.0
    %555 = vmatpush2.msra.mxu0 0.0
    %556 = vmatprep.subr.mxu0 0.0
    %557 = vmatpush2.msra.mxu0 0.0
    %558 = vmatprep.subr.mxu0 0.0
    %559 = vmatpush2.msra.mxu0 0.0
    %560 = vmatprep.subr.mxu0 0.0
    %561 = vmatpush2.msra.mxu0 0.0
    %562 = vmatprep.subr.mxu0 0.0
    %563 = vmatpush2.msra.mxu0 0.0
    %564 = vmatprep.subr.mxu0 0.0
    %565 = vmatpush2.msra.mxu0 0.0
    %566 = vmatprep.subr.mxu0 0.0
    %567 = vmatpush2.msra.mxu0 0.0
    %568 = vmatprep.subr.mxu0 0.0
    %569 = vmatpush2.msra.mxu0 0.0
    %570 = vmatprep.subr.mxu0 0.0
    %571 = vmatpush2.msra.mxu0 0.0
    %572 = vmatprep.subr.mxu0 0.0
    %573 = vmatpush2.msra.mxu0 0.0
    %574 = vmatprep.subr.mxu0 0.0
    %575 = vmatpush2.msra.mxu0 0.0
    %576 = vmatprep.subr.mxu0 0.0
    %577 = vmatpush2.msra.mxu0 0.0
    %578 = vmatprep.subr.mxu0 0.0
    %579 = vmatpush2.msra.mxu0 0.0
    %580 = vmatprep.subr.mxu0 0.0
    %581 = vmatpush2.msra.mxu0 0.0
    %582 = vmatprep.mubr.f32.mxu0 0.0
    %583 = vmatmul.mubr.f32.gmra.mxu0 %v498
    %v584 = vpop.f32.mrf.mxu0
    %v585 = vadd.f32 0.0, %v584
    %v586 = vpop.f32.mrf.mxu0
    %587 = vdwg.mxu0
    %v588 = vadd.f32 %v501, %v585
    %v589 = vxor.u32 %v588, 2147483648
    %v590 = vmul.f32 %v589, 1.442695
    %v591 = vpow.pop %v590
    %v592 = vadd.f32 %v591, 1.0
    %v593 = vrcp.pop %v592
    %v594 = vmul.f32 1.0, %v593
    %v595 = vtanh.pop %v588
    %596 = vrot.lane.b32.xlu0 %v594, 96
    %v597 = vpop.permute.xlu0 %596
    %598 = vrot.lane.b32.xlu0 %v595, 64
    %v599 = vpop.permute.xlu0 %598
    %600 = vrot.lane.b32.xlu0 %v594, 32
    %v601 = vpop.permute.xlu0 %600
    %v602 = vmul.f32 %v597, %v496
    %v603 = vmul.f32 %v594, %v599
    %v604 = vadd.f32 %v602, %v603
    %v605 = vtanh.pop %v604
    %v606 = vmul.f32 %v601, %v605
    %607 = vst [vmem:[#allocation2 + $0x4] sm:$0x1] %v606
    %608 = vst [vmem:[#allocation2 + $0xb] sm:$0x2] %v606
    %v609 = vld [vmem:[#allocation3 + $0xa] sm:$0x3]
    %v610 = vld [vmem:[#allocation6] sm:$0xff]
    %v611 = vld [vmem:[#allocation6 + $0x8] sm:$0xff]
    %v612 = vld [vmem:[#allocation6 + $0x10] sm:$0xff]
    %v613 = vld [vmem:[#allocation6 + $0x18] sm:$0xff]
    %v614 = vld [vmem:[#allocation6 + $0x20] sm:$0xff]
    %v615 = vld [vmem:[#allocation6 + $0x28] sm:$0xff]
    %v616 = vld [vmem:[#allocation6 + $0x30] sm:$0xff]
    %v617 = vld [vmem:[#allocation6 + $0x38] sm:$0xff]
    %v618 = vld [vmem:[#allocation6 + $0x40] sm:$0xff]
    %v619 = vld [vmem:[#allocation6 + $0x48] sm:$0xff]
    %v620 = vld [vmem:[#allocation6 + $0x50] sm:$0xff]
    %v621 = vld [vmem:[#allocation6 + $0x58] sm:$0xff]
    %v622 = vld [vmem:[#allocation6 + $0x60] sm:$0xff]
    %v623 = vld [vmem:[#allocation6 + $0x68] sm:$0xff]
    %v624 = vld [vmem:[#allocation6 + $0x70] sm:$0xff]
    %v625 = vld [vmem:[#allocation6 + $0x78] sm:$0xff]
    %626 = vmatprep.subr.mxu0 0.0
    %627 = vmatpush1.msra.mxu0 %v625
    %628 = vmatprep.subr.mxu0 0.0
    %629 = vmatpush1.msra.mxu0 %v624
    %630 = vmatprep.subr.mxu0 0.0
    %631 = vmatpush1.msra.mxu0 %v623
    %632 = vmatprep.subr.mxu0 0.0
    %633 = vmatpush1.msra.mxu0 %v622
    %634 = vmatprep.subr.mxu0 0.0
    %635 = vmatpush1.msra.mxu0 %v621
    %636 = vmatprep.subr.mxu0 0.0
    %637 = vmatpush1.msra.mxu0 %v620
    %638 = vmatprep.subr.mxu0 0.0
    %639 = vmatpush1.msra.mxu0 %v619
    %640 = vmatprep.subr.mxu0 0.0
    %641 = vmatpush1.msra.mxu0 %v618
    %642 = vmatprep.subr.mxu0 0.0
    %643 = vmatpush1.msra.mxu0 %v617
    %644 = vmatprep.subr.mxu0 0.0
    %645 = vmatpush1.msra.mxu0 %v616
    %646 = vmatprep.subr.mxu0 0.0
    %647 = vmatpush1.msra.mxu0 %v615
    %648 = vmatprep.subr.mxu0 0.0
    %649 = vmatpush1.msra.mxu0 %v614
    %650 = vmatprep.subr.mxu0 0.0
    %651 = vmatpush1.msra.mxu0 %v613
    %652 = vmatprep.subr.mxu0 0.0
    %653 = vmatpush1.msra.mxu0 %v612
    %654 = vmatprep.subr.mxu0 0.0
    %655 = vmatpush1.msra.mxu0 %v611
    %656 = vmatprep.subr.mxu0 0.0
    %657 = vmatpush1.msra.mxu0 %v610
    %658 = vmatprep.subr.mxu0 0.0
    %659 = vmatpush2.msra.mxu0 0.0
    %660 = vmatprep.subr.mxu0 0.0
    %661 = vmatpush2.msra.mxu0 0.0
    %662 = vmatprep.subr.mxu0 0.0
    %663 = vmatpush2.msra.mxu0 0.0
    %664 = vmatprep.subr.mxu0 0.0
    %665 = vmatpush2.msra.mxu0 0.0
    %666 = vmatprep.subr.mxu0 0.0
    %667 = vmatpush2.msra.mxu0 0.0
    %668 = vmatprep.subr.mxu0 0.0
    %669 = vmatpush2.msra.mxu0 0.0
    %670 = vmatprep.subr.mxu0 0.0
    %671 = vmatpush2.msra.mxu0 0.0
    %672 = vmatprep.subr.mxu0 0.0
    %673 = vmatpush2.msra.mxu0 0.0
    %674 = vmatprep.subr.mxu0 0.0
    %675 = vmatpush2.msra.mxu0 0.0
    %676 = vmatprep.subr.mxu0 0.0
    %677 = vmatpush2.msra.mxu0 0.0
    %678 = vmatprep.subr.mxu0 0.0
    %679 = vmatpush2.msra.mxu0 0.0
    %680 = vmatprep.subr.mxu0 0.0
    %681 = vmatpush2.msra.mxu0 0.0
    %682 = vmatprep.subr.mxu0 0.0
    %683 = vmatpush2.msra.mxu0 0.0
    %684 = vmatprep.subr.mxu0 0.0
    %685 = vmatpush2.msra.mxu0 0.0
    %686 = vmatprep.subr.mxu0 0.0
    %687 = vmatpush2.msra.mxu0 0.0
    %688 = vmatprep.subr.mxu0 0.0
    %689 = vmatpush2.msra.mxu0 0.0
    %690 = vmatprep.mubr.f32.mxu0 0.0
    %691 = vmatmul.mubr.f32.gmra.mxu0 %v606
    %v692 = vpop.f32.mrf.mxu0
    %v693 = vadd.f32 0.0, %v692
    %v694 = vpop.f32.mrf.mxu0
    %695 = vdwg.mxu0
    %v696 = vadd.f32 %v609, %v693
    %v697 = vxor.u32 %v696, 2147483648
    %v698 = vmul.f32 %v697, 1.442695
    %v699 = vpow.pop %v698
    %v700 = vadd.f32 %v699, 1.0
    %v701 = vrcp.pop %v700
    %v702 = vmul.f32 1.0, %v701
    %v703 = vtanh.pop %v696
    %704 = vrot.lane.b32.xlu0 %v702, 96
    %v705 = vpop.permute.xlu0 %704
    %706 = vrot.lane.b32.xlu0 %v703, 64
    %v707 = vpop.permute.xlu0 %706
    %708 = vrot.lane.b32.xlu0 %v702, 32
    %v709 = vpop.permute.xlu0 %708
    %v710 = vmul.f32 %v705, %v604
    %v711 = vmul.f32 %v702, %v707
    %v712 = vadd.f32 %v710, %v711
    %v713 = vtanh.pop %v712
    %v714 = vmul.f32 %v709, %v713
    %715 = vst [vmem:[#allocation2 + $0x5] sm:$0x1] %v714
    %716 = vst [vmem:[#allocation2 + $0xc] sm:$0x2] %v714
    %v717 = vld [vmem:[#allocation3 + $0xc] sm:$0x3]
    %v718 = vld [vmem:[#allocation6] sm:$0xff]
    %v719 = vld [vmem:[#allocation6 + $0x8] sm:$0xff]
    %v720 = vld [vmem:[#allocation6 + $0x10] sm:$0xff]
    %v721 = vld [vmem:[#allocation6 + $0x18] sm:$0xff]
    %v722 = vld [vmem:[#allocation6 + $0x20] sm:$0xff]
    %v723 = vld [vmem:[#allocation6 + $0x28] sm:$0xff]
    %v724 = vld [vmem:[#allocation6 + $0x30] sm:$0xff]
    %v725 = vld [vmem:[#allocation6 + $0x38] sm:$0xff]
    %v726 = vld [vmem:[#allocation6 + $0x40] sm:$0xff]
    %v727 = vld [vmem:[#allocation6 + $0x48] sm:$0xff]
    %v728 = vld [vmem:[#allocation6 + $0x50] sm:$0xff]
    %v729 = vld [vmem:[#allocation6 + $0x58] sm:$0xff]
    %v730 = vld [vmem:[#allocation6 + $0x60] sm:$0xff]
    %v731 = vld [vmem:[#allocation6 + $0x68] sm:$0xff]
    %v732 = vld [vmem:[#allocation6 + $0x70] sm:$0xff]
    %v733 = vld [vmem:[#allocation6 + $0x78] sm:$0xff]
    %734 = vmatprep.subr.mxu0 0.0
    %735 = vmatpush1.msra.mxu0 %v733
    %736 = vmatprep.subr.mxu0 0.0
    %737 = vmatpush1.msra.mxu0 %v732
    %738 = vmatprep.subr.mxu0 0.0
    %739 = vmatpush1.msra.mxu0 %v731
    %740 = vmatprep.subr.mxu0 0.0
    %741 = vmatpush1.msra.mxu0 %v730
    %742 = vmatprep.subr.mxu0 0.0
    %743 = vmatpush1.msra.mxu0 %v729
    %744 = vmatprep.subr.mxu0 0.0
    %745 = vmatpush1.msra.mxu0 %v728
    %746 = vmatprep.subr.mxu0 0.0
    %747 = vmatpush1.msra.mxu0 %v727
    %748 = vmatprep.subr.mxu0 0.0
    %749 = vmatpush1.msra.mxu0 %v726
    %750 = vmatprep.subr.mxu0 0.0
    %751 = vmatpush1.msra.mxu0 %v725
    %752 = vmatprep.subr.mxu0 0.0
    %753 = vmatpush1.msra.mxu0 %v724
    %754 = vmatprep.subr.mxu0 0.0
    %755 = vmatpush1.msra.mxu0 %v723
    %756 = vmatprep.subr.mxu0 0.0
    %757 = vmatpush1.msra.mxu0 %v722
    %758 = vmatprep.subr.mxu0 0.0
    %759 = vmatpush1.msra.mxu0 %v721
    %760 = vmatprep.subr.mxu0 0.0
    %761 = vmatpush1.msra.mxu0 %v720
    %762 = vmatprep.subr.mxu0 0.0
    %763 = vmatpush1.msra.mxu0 %v719
    %764 = vmatprep.subr.mxu0 0.0
    %765 = vmatpush1.msra.mxu0 %v718
    %766 = vmatprep.subr.mxu0 0.0
    %767 = vmatpush2.msra.mxu0 0.0
    %768 = vmatprep.subr.mxu0 0.0
    %769 = vmatpush2.msra.mxu0 0.0
    %770 = vmatprep.subr.mxu0 0.0
    %771 = vmatpush2.msra.mxu0 0.0
    %772 = vmatprep.subr.mxu0 0.0
    %773 = vmatpush2.msra.mxu0 0.0
    %774 = vmatprep.subr.mxu0 0.0
    %775 = vmatpush2.msra.mxu0 0.0
    %776 = vmatprep.subr.mxu0 0.0
    %777 = vmatpush2.msra.mxu0 0.0
    %778 = vmatprep.subr.mxu0 0.0
    %779 = vmatpush2.msra.mxu0 0.0
    %780 = vmatprep.subr.mxu0 0.0
    %781 = vmatpush2.msra.mxu0 0.0
    %782 = vmatprep.subr.mxu0 0.0
    %783 = vmatpush2.msra.mxu0 0.0
    %784 = vmatprep.subr.mxu0 0.0
    %785 = vmatpush2.msra.mxu0 0.0
    %786 = vmatprep.subr.mxu0 0.0
    %787 = vmatpush2.msra.mxu0 0.0
    %788 = vmatprep.subr.mxu0 0.0
    %789 = vmatpush2.msra.mxu0 0.0
    %790 = vmatprep.subr.mxu0 0.0
    %791 = vmatpush2.msra.mxu0 0.0
    %792 = vmatprep.subr.mxu0 0.0
    %793 = vmatpush2.msra.mxu0 0.0
    %794 = vmatprep.subr.mxu0 0.0
    %795 = vmatpush2.msra.mxu0 0.0
    %796 = vmatprep.subr.mxu0 0.0
    %797 = vmatpush2.msra.mxu0 0.0
    %798 = vmatprep.mubr.f32.mxu0 0.0
    %799 = vmatmul.mubr.f32.gmra.mxu0 %v714
    %v800 = vpop.f32.mrf.mxu0
    %v801 = vadd.f32 0.0, %v800
    %v802 = vpop.f32.mrf.mxu0
    %803 = vdwg.mxu0
    %v804 = vadd.f32 %v717, %v801
    %v805 = vxor.u32 %v804, 2147483648
    %v806 = vmul.f32 %v805, 1.442695
    %v807 = vpow.pop %v806
    %v808 = vadd.f32 %v807, 1.0
    %v809 = vrcp.pop %v808
    %v810 = vmul.f32 1.0, %v809
    %v811 = vtanh.pop %v804
    %812 = vrot.lane.b32.xlu0 %v810, 96
    %v813 = vpop.permute.xlu0 %812
    %814 = vrot.lane.b32.xlu0 %v811, 64
    %v815 = vpop.permute.xlu0 %814
    %816 = vrot.lane.b32.xlu0 %v810, 32
    %v817 = vpop.permute.xlu0 %816
    %v818 = vmul.f32 %v813, %v712
    %v819 = vmul.f32 %v810, %v815
    %v820 = vadd.f32 %v818, %v819
    %v821 = vtanh.pop %v820
    %v822 = vmul.f32 %v817, %v821
    %823 = vst [vmem:[#allocation2 + $0x6] sm:$0x1] %v822
    %824 = vst [vmem:[#allocation2 + $0xd] sm:$0x2] %v822
    %v825 = vld [vmem:[#allocation3 + $0xe] sm:$0x3]
    %v826 = vld [vmem:[#allocation6] sm:$0xff]
    %v827 = vld [vmem:[#allocation6 + $0x8] sm:$0xff]
    %v828 = vld [vmem:[#allocation6 + $0x10] sm:$0xff]
    %v829 = vld [vmem:[#allocation6 + $0x18] sm:$0xff]
    %v830 = vld [vmem:[#allocation6 + $0x20] sm:$0xff]
    %v831 = vld [vmem:[#allocation6 + $0x28] sm:$0xff]
    %v832 = vld [vmem:[#allocation6 + $0x30] sm:$0xff]
    %v833 = vld [vmem:[#allocation6 + $0x38] sm:$0xff]
    %v834 = vld [vmem:[#allocation6 + $0x40] sm:$0xff]
    %v835 = vld [vmem:[#allocation6 + $0x48] sm:$0xff]
    %v836 = vld [vmem:[#allocation6 + $0x50] sm:$0xff]
    %v837 = vld [vmem:[#allocation6 + $0x58] sm:$0xff]
    %v838 = vld [vmem:[#allocation6 + $0x60] sm:$0xff]
    %v839 = vld [vmem:[#allocation6 + $0x68] sm:$0xff]
    %v840 = vld [vmem:[#allocation6 + $0x70] sm:$0xff]
    %v841 = vld [vmem:[#allocation6 + $0x78] sm:$0xff]
    %842 = vmatprep.subr.mxu0 0.0
    %843 = vmatpush1.msra.mxu0 %v841
    %844 = vmatprep.subr.mxu0 0.0
    %845 = vmatpush1.msra.mxu0 %v840
    %846 = vmatprep.subr.mxu0 0.0
    %847 = vmatpush1.msra.mxu0 %v839
    %848 = vmatprep.subr.mxu0 0.0
    %849 = vmatpush1.msra.mxu0 %v838
    %850 = vmatprep.subr.mxu0 0.0
    %851 = vmatpush1.msra.mxu0 %v837
    %852 = vmatprep.subr.mxu0 0.0
    %853 = vmatpush1.msra.mxu0 %v836
    %854 = vmatprep.subr.mxu0 0.0
    %855 = vmatpush1.msra.mxu0 %v835
    %856 = vmatprep.subr.mxu0 0.0
    %857 = vmatpush1.msra.mxu0 %v834
    %858 = vmatprep.subr.mxu0 0.0
    %859 = vmatpush1.msra.mxu0 %v833
    %860 = vmatprep.subr.mxu0 0.0
    %861 = vmatpush1.msra.mxu0 %v832
    %862 = vmatprep.subr.mxu0 0.0
    %863 = vmatpush1.msra.mxu0 %v831
    %864 = vmatprep.subr.mxu0 0.0
    %865 = vmatpush1.msra.mxu0 %v830
    %866 = vmatprep.subr.mxu0 0.0
    %867 = vmatpush1.msra.mxu0 %v829
    %868 = vmatprep.subr.mxu0 0.0
    %869 = vmatpush1.msra.mxu0 %v828
    %870 = vmatprep.subr.mxu0 0.0
    %871 = vmatpush1.msra.mxu0 %v827
    %872 = vmatprep.subr.mxu0 0.0
    %873 = vmatpush1.msra.mxu0 %v826
    %874 = vmatprep.subr.mxu0 0.0
    %875 = vmatpush2.msra.mxu0 0.0
    %876 = vmatprep.subr.mxu0 0.0
    %877 = vmatpush2.msra.mxu0 0.0
    %878 = vmatprep.subr.mxu0 0.0
    %879 = vmatpush2.msra.mxu0 0.0
    %880 = vmatprep.subr.mxu0 0.0
    %881 = vmatpush2.msra.mxu0 0.0
    %882 = vmatprep.subr.mxu0 0.0
    %883 = vmatpush2.msra.mxu0 0.0
    %884 = vmatprep.subr.mxu0 0.0
    %885 = vmatpush2.msra.mxu0 0.0
    %886 = vmatprep.subr.mxu0 0.0
    %887 = vmatpush2.msra.mxu0 0.0
    %888 = vmatprep.subr.mxu0 0.0
    %889 = vmatpush2.msra.mxu0 0.0
    %890 = vmatprep.subr.mxu0 0.0
    %891 = vmatpush2.msra.mxu0 0.0
    %892 = vmatprep.subr.mxu0 0.0
    %893 = vmatpush2.msra.mxu0 0.0
    %894 = vmatprep.subr.mxu0 0.0
    %895 = vmatpush2.msra.mxu0 0.0
    %896 = vmatprep.subr.mxu0 0.0
    %897 = vmatpush2.msra.mxu0 0.0
    %898 = vmatprep.subr.mxu0 0.0
    %899 = vmatpush2.msra.mxu0 0.0
    %900 = vmatprep.subr.mxu0 0.0
    %901 = vmatpush2.msra.mxu0 0.0
    %902 = vmatprep.subr.mxu0 0.0
    %903 = vmatpush2.msra.mxu0 0.0
    %904 = vmatprep.subr.mxu0 0.0
    %905 = vmatpush2.msra.mxu0 0.0
    %906 = vmatprep.mubr.f32.mxu0 0.0
    %907 = vmatmul.mubr.f32.gmra.mxu0 %v822
    %v908 = vpop.f32.mrf.mxu0
    %v909 = vadd.f32 0.0, %v908
    %v910 = vpop.f32.mrf.mxu0
    %911 = vdwg.mxu0
    %v912 = vadd.f32 %v825, %v909
    %v913 = vxor.u32 %v912, 2147483648
    %v914 = vmul.f32 %v913, 1.442695
    %v915 = vpow.pop %v914
    %v916 = vadd.f32 %v915, 1.0
    %v917 = vrcp.pop %v916
    %v918 = vmul.f32 1.0, %v917
    %v919 = vtanh.pop %v912
    %920 = vrot.lane.b32.xlu0 %v918, 96
    %v921 = vpop.permute.xlu0 %920
    %922 = vrot.lane.b32.xlu0 %v919, 64
    %v923 = vpop.permute.xlu0 %922
    %924 = vrot.lane.b32.xlu0 %v918, 32
    %v925 = vpop.permute.xlu0 %924
    %v926 = vmul.f32 %v921, %v820
    %v927 = vmul.f32 %v918, %v923
    %v928 = vadd.f32 %v926, %v927
    %v929 = vtanh.pop %v928
    %v930 = vmul.f32 %v925, %v929
    %931 = vst [vmem:[#allocation2 + $0x7] sm:$0x1] %v930
    %932 = vst [vmem:[#allocation2 + $0xe] sm:$0x2] %v930
    %v933 = vlaneseq
    %v934 = vand.u32 %v933, 127
    %vm935 = vcmp.lt.s32.totalorder %v934, 32
    %v936 = vsel %vm935, 1, 0
    %v937 = vcvt.s32.f32 %v936
    %v938 = vmul.f32 %v930, %v937
    %939 = vst [vmem:[#allocation10] sm:$0x3] %v938
    %v940 = vmul.f32 %v928, %v937
    %941 = vst [vmem:[#allocation12] sm:$0x3] %v940
    %v942 = vld [vmem:[#allocation2] sm:$0xff]
    %v943 = vld [vmem:[#allocation2 + $0x8] sm:$0xff]
    %v944 = vld [vmem:[#allocation8] sm:$0xff]
    %v945 = vld [vmem:[#allocation8 + $0x8] sm:$0xff]
    %v946 = vld [vmem:[#allocation8 + $0x10] sm:$0xff]
    %v947 = vld [vmem:[#allocation8 + $0x18] sm:$0xff]
    %v948 = vld [vmem:[#allocation8 + $0x20] sm:$0xff]
    %v949 = vld [vmem:[#allocation8 + $0x28] sm:$0xff]
    %v950 = vld [vmem:[#allocation8 + $0x30] sm:$0xff]
    %v951 = vld [vmem:[#allocation8 + $0x38] sm:$0xff]
    %v952 = vld [vmem:[#allocation8 + $0x40] sm:$0xff]
    %v953 = vld [vmem:[#allocation8 + $0x48] sm:$0xff]
    %v954 = vld [vmem:[#allocation8 + $0x50] sm:$0xff]
    %v955 = vld [vmem:[#allocation8 + $0x58] sm:$0xff]
    %v956 = vld [vmem:[#allocation8 + $0x60] sm:$0xff]
    %v957 = vld [vmem:[#allocation8 + $0x68] sm:$0xff]
    %v958 = vld [vmem:[#allocation8 + $0x70] sm:$0xff]
    %v959 = vld [vmem:[#allocation8 + $0x78] sm:$0xff]
    %v960 = vld [vmem:[%s3] sm:$0x1]
    %v962 = vlaneseq
    %v963 = vshrl.u32 %v962, 7
    %v964 = vsub.s32 0, %v963
    %v965 = vrot.slane %v960, %v964
    %967 = vmatprep.subr.mxu0 0.0
    %968 = vmatpush1.msra.mxu0 %v959
    %969 = vmatprep.subr.mxu0 0.0
    %970 = vmatpush1.msra.mxu0 %v958
    %971 = vmatprep.subr.mxu0 0.0
    %972 = vmatpush1.msra.mxu0 %v957
    %973 = vmatprep.subr.mxu0 0.0
    %974 = vmatpush1.msra.mxu0 %v956
    %975 = vmatprep.subr.mxu0 0.0
    %976 = vmatpush1.msra.mxu0 %v955
    %977 = vmatprep.subr.mxu0 0.0
    %978 = vmatpush1.msra.mxu0 %v954
    %979 = vmatprep.subr.mxu0 0.0
    %980 = vmatpush1.msra.mxu0 %v953
    %981 = vmatprep.subr.mxu0 0.0
    %982 = vmatpush1.msra.mxu0 %v952
    %983 = vmatprep.subr.mxu0 0.0
    %984 = vmatpush1.msra.mxu0 %v951
    %985 = vmatprep.subr.mxu0 0.0
    %986 = vmatpush1.msra.mxu0 %v950
    %987 = vmatprep.subr.mxu0 0.0
    %988 = vmatpush1.msra.mxu0 %v949
    %989 = vmatprep.subr.mxu0 0.0
    %990 = vmatpush1.msra.mxu0 %v948
    %991 = vmatprep.subr.mxu0 0.0
    %992 = vmatpush1.msra.mxu0 %v947
    %993 = vmatprep.subr.mxu0 0.0
    %994 = vmatpush1.msra.mxu0 %v946
    %995 = vmatprep.subr.mxu0 0.0
    %996 = vmatpush1.msra.mxu0 %v945
    %997 = vmatprep.subr.mxu0 0.0
    %998 = vmatpush1.msra.mxu0 %v944
    %999 = vmatprep.subr.mxu0 0.0
    %1000 = vmatpush2.msra.mxu0 0.0
    %1001 = vmatprep.subr.mxu0 0.0
    %1002 = vmatpush2.msra.mxu0 0.0
    %1003 = vmatprep.subr.mxu0 0.0
    %1004 = vmatpush2.msra.mxu0 0.0
    %1005 = vmatprep.subr.mxu0 0.0
    %1006 = vmatpush2.msra.mxu0 0.0
    %1007 = vmatprep.subr.mxu0 0.0
    %1008 = vmatpush2.msra.mxu0 0.0
    %1009 = vmatprep.subr.mxu0 0.0
    %1010 = vmatpush2.msra.mxu0 0.0
    %1011 = vmatprep.subr.mxu0 0.0
    %1012 = vmatpush2.msra.mxu0 0.0
    %1013 = vmatprep.subr.mxu0 0.0
    %1014 = vmatpush2.msra.mxu0 0.0
    %1015 = vmatprep.subr.mxu0 0.0
    %1016 = vmatpush2.msra.mxu0 0.0
    %1017 = vmatprep.subr.mxu0 0.0
    %1018 = vmatpush2.msra.mxu0 0.0
    %1019 = vmatprep.subr.mxu0 0.0
    %1020 = vmatpush2.msra.mxu0 0.0
    %1021 = vmatprep.subr.mxu0 0.0
    %1022 = vmatpush2.msra.mxu0 0.0
    %1023 = vmatprep.subr.mxu0 0.0
    %1024 = vmatpush2.msra.mxu0 0.0
    %1025 = vmatprep.subr.mxu0 0.0
    %1026 = vmatpush2.msra.mxu0 0.0
    %1027 = vmatprep.subr.mxu0 0.0
    %1028 = vmatpush2.msra.mxu0 0.0
    %1029 = vmatprep.subr.mxu0 0.0
    %1030 = vmatpush2.msra.mxu0 0.0
    %1031 = vmatprep.mubr.f32.mxu0 0.0
    %1032 = vmatmul.mubr.f32.gmra.mxu0 %v942
    %v1033 = vpop.f32.mrf.mxu0
    %v1034 = vadd.f32 %v965, %v1033
    %v1035 = vpop.f32.mrf.mxu0
    %1036 = vmatprep.mubr.f32.mxu0 0.0
    %1037 = vmatmul.mubr.f32.gmra.mxu0 %v943
    %v1038 = vpop.f32.mrf.mxu0
    %v1039 = vadd.f32 %v965, %v1038
    %v1040 = vpop.f32.mrf.mxu0
    %1041 = vdwg.mxu0
    %v1042 = vadd.f32 %v1034, %v1039
    %v1043 = vrot.slane %v1042, 4
    %v1044 = vadd.f32 %v1042, %v1043
    %v1045 = vrot.slane %v1044, 2
    %v1046 = vadd.f32 %v1044, %v1045
    %v1047 = vrot.slane %v1046, 1
    %v1048 = vadd.f32 %v1046, %v1047
    %v1049 = vrcp.pop 16.0
    %v1050 = vmul.f32 %v1048, %v1049
    %v1051 = vsub.f32 %v1034, %v1050
    %v1052 = vsub.f32 %v1039, %v1050
    %v1053 = vmul.f32 %v1051, %v1051
    %v1054 = vmul.f32 %v1052, %v1052
    %v1055 = vadd.f32 %v1053, %v1054
    %v1056 = vrot.slane %v1055, 4
    %v1057 = vadd.f32 %v1055, %v1056
    %v1058 = vrot.slane %v1057, 2
    %v1059 = vadd.f32 %v1057, %v1058
    %v1060 = vrot.slane %v1059, 1
    %v1061 = vadd.f32 %v1059, %v1060
    %v1062 = vmul.f32 %v1061, %v1049
    %v1063 = vadd.f32 %v1062, 1e-05
    %v1064 = vrsqrt.pop %v1063
    %v1065 = vmul.f32 %v1051, %v1064
    %v1066 = vmul.f32 %v1052, %v1064
    %v1067 = vld [vmem:[%s4] sm:$0x1]
    %v1069 = vlaneseq
    %v1070 = vshrl.u32 %v1069, 7
    %v1071 = vsub.s32 0, %v1070
    %v1072 = vrot.slane %v1067, %v1071
    %v1074 = vmul.f32 %v1065, %v1072
    %v1075 = vmul.f32 %v1066, %v1072
    %v1076 = vld [vmem:[%s5] sm:$0x1]
    %v1078 = vlaneseq
    %v1079 = vshrl.u32 %v1078, 7
    %v1080 = vsub.s32 0, %v1079
    %v1081 = vrot.slane %v1076, %v1080
    %v1083 = vadd.f32 %v1074, %v1081
    %v1084 = vadd.f32 %v1075, %v1081
    %1085 = vst [vmem:[#allocation9] sm:$0xff] %v1083
    %1086 = vst [vmem:[#allocation9 + $0x8] sm:$0xff] %v1084
    // Predicated region
    $region38: #{tpu_custom_call.1} parent=1 // pred_check
      _
    $region39: #{tpu_custom_call.1} parent=1 // pred_check_branch
      %1088 = sbr.rel (0) target = $region41
    $region40: #{tpu_custom_call.1} parent=1 // pred_region
      %s1090 = ssub.s32 256, 256
      %1091 = vsyncadd [#allocation5], %s1090
      %s1092 = sshll.u32 [#allocation9], 4
      %s1093 = int_to_ptr.vmem [resolvable:$true] %s1092
      %1098 = dma.vmem_to_hbm [thread:$0]  %s1093, 256, %s6, [#allocation5], 128, 128, 8
    $region41: #{tpu_custom_call.1} parent=1 // pred_fallthru
      _
    // Predicated region
    $region42: #{tpu_custom_call.1} parent=1 // pred_check
      _
    $region43: #{tpu_custom_call.1} parent=1 // pred_check_branch
      %1100 = sbr.rel (0) target = $region45
    $region44: #{tpu_custom_call.1} parent=1 // pred_region
      %s1102 = ssub.s32 32, 32
      %1103 = vsyncadd [#allocation11], %s1102
      %s1105 = sshll.u32 [#allocation10], 4
      %s1106 = int_to_ptr.vmem [resolvable:$true] %s1105
      %1108 = dma.vmem_to_hbm [thread:$0]  %s1106, 32, %s7, [#allocation11]
    $region45: #{tpu_custom_call.1} parent=1 // pred_fallthru
      _
    // Predicated region
    $region46: #{tpu_custom_call.1} parent=1 // pred_check
      _
    $region47: #{tpu_custom_call.1} parent=1 // pred_check_branch
      %1110 = sbr.rel (0) target = $region49
    $region48: #{tpu_custom_call.1} parent=1 // pred_region
      %s1112 = ssub.s32 32, 32
      %1113 = vsyncadd [#allocation11], %s1112
      %s1115 = sshll.u32 [#allocation12], 4
      %s1116 = int_to_ptr.vmem [resolvable:$true] %s1115
      %1118 = dma.vmem_to_hbm [thread:$0]  %s1116, 32, %s8, [#allocation11]
    $region49: #{tpu_custom_call.1} parent=1 // pred_fallthru
      _
    // Predicated region
    $region50: #{tpu_custom_call.1} parent=1 // pred_check
      _
    $region51: #{tpu_custom_call.1} parent=1 // pred_check_branch
      %1120 = sbr.rel (0) target = $region53
    $region52: #{tpu_custom_call.1} parent=1 // pred_region
      %1121 = dma.done [#allocation5], 256
    $region53: #{tpu_custom_call.1} parent=1 // pred_fallthru
      _
    // Predicated region
    $region54: #{tpu_custom_call.1} parent=1 // pred_check
      _
    $region55: #{tpu_custom_call.1} parent=1 // pred_check_branch
      %1123 = sbr.rel (0) target = $region57
    $region56: #{tpu_custom_call.1} parent=1 // pred_region
      %1124 = dma.done [#allocation11], 32
    $region57: #{tpu_custom_call.1} parent=1 // pred_fallthru
      _
    // Predicated region
    $region58: #{tpu_custom_call.1} parent=1 // pred_check
      _
    $region59: #{tpu_custom_call.1} parent=1 // pred_check_branch
      %1126 = sbr.rel (0) target = $region61
    $region60: #{tpu_custom_call.1} parent=1 // pred_region
      %1127 = dma.done [#allocation11], 32
    $region61: #{tpu_custom_call.1} parent=1 // pred_fallthru
      _
    %1128 = vsyncpa [#allocation4], 1
    %1129 = vsyncpa [#allocation7], 1
    %1130 = vsyncpa [#allocation5], 1
    %1131 = vsyncpa [#allocation11], 1

</llo_original>
